<compile_context>
chip_gen: v5e
topology: v5e:2x2
jax: 0.10.0
libtpu: 0.0.40
codegen_flags: <defaults>
</compile_context>

<pallas_src>
import math

import jax
import jax.numpy as jnp
from jax.experimental import pallas as pl
from jax.experimental.pallas import tpu as pltpu


# ---------------------------------------------------------------------------
# helpers
# ---------------------------------------------------------------------------
def _pick_head_block(num_heads, head_dim, k):
    """Smallest head-block such that both lane widths (hb*D, hb*k) are 128-multiples.

    Smallest (not largest) keeps the block-diagonal FLOP inflation at the minimum
    needed for lane-dense MXU tiles."""
    for hb in range(1, num_heads + 1):
        if num_heads % hb == 0 and (hb * head_dim) % 128 == 0 and (hb * k) % 128 == 0:
            return hb
    return num_heads  # full-extent blocks are always legal


def _derive_vmem_limit(N, C, hbd, G, h_blk):
    """Shape-derived scoped-VMEM budget (review: don't use a blanket 48 MiB).

    Double-buffered pipeline blocks + f32 accumulator + in-body f32 temporaries,
    plus headroom for Mosaic internal scratch; clamped to [32 MiB, 64 MiB]."""
    blocks = (N * C + C * hbd + hbd            # x, Wtrans slice, b_trans slice
              + hbd * G + G                    # W0 block-diag, b0
              + G * h_blk + h_blk * G          # Pg, Pg^T
              + G * hbd + hbd                  # W1 block-diag, b1
              + hbd * C + C                    # Wproj slice, b_proj
              + N * C) * 4                     # output block
    temps = (6 * N * G + 2 * N * hbd + 2 * N * h_blk + N * C) * 4
    est = 2 * blocks + temps + (4 << 20)
    return int(max(32 << 20, min(est, 64 << 20)))


# ---------------------------------------------------------------------------
# Fused kernel: per (batch b, head-block j)
#   y = x[b] @ Wtrans[:, blk] + b_trans[blk]
#   a = y @ W0_bd + b0 ; softmax over tokens ; a *= 1/(1e-9 + per-head k-sum)
#   z = a @ W1_bd + b1
#   acc += z @ Wproj[blk, :]          (f32 accumulator across head blocks)
#   out[b] = acc + b_proj             (at the last head block)
# ---------------------------------------------------------------------------
def _fused_kernel(x_ref, wt_ref, bt_ref, w0_ref, b0_ref, pg_ref, pgt_ref,
                  w1_ref, b1_ref, wp_ref, bp_ref, o_ref, acc_ref):
    j = pl.program_id(1)

    @pl.when(j == 0)
    def _():
        acc_ref[...] = jnp.zeros_like(acc_ref)

    cd = wt_ref.dtype                           # MXU input dtype (f32 here; bf16 in prod on v6e/v7x)
    x = x_ref[0].astype(cd)                                                        # (N, C)

    # trans_dims restricted to this head block's output columns
    y = jnp.dot(x, wt_ref[...], preferred_element_type=jnp.float32) + bt_ref[...]  # (N, hbd)

    # linear_0 for all heads of the block via block-diagonal weight (one dense MXU op)
    a = (jnp.dot(y.astype(cd), w0_ref[...], preferred_element_type=jnp.float32)
         + b0_ref[...])                                                            # (N, G)

    # softmax over the token axis N (== torch softmax(dim=-2)); reciprocal-multiply, no divide
    m = jnp.max(a, axis=0, keepdims=True)
    e = jnp.exp(a - m)
    attn = e * pl.reciprocal(jnp.sum(e, axis=0, keepdims=True))                    # (N, G)

    # attn /= (1e-9 + sum over k) per (token, head): reciprocal on the narrow (N, h_blk)
    # per-head sums, broadcast back through the Pg^T matmul (no in-kernel lane reshape).
    s_head = jnp.dot(attn, pg_ref[...], preferred_element_type=jnp.float32)        # (N, h_blk)
    inv_full = jnp.dot(pl.reciprocal(1e-9 + s_head), pgt_ref[...],
                       preferred_element_type=jnp.float32)                         # (N, G)
    attn = attn * inv_full
    # TODO(synk): attn_drop / proj_drop are identity (p=0.0, eval mode) and not implemented.

    # linear_1 (block-diagonal) back to (N, hbd)
    z = (jnp.dot(attn.astype(cd), w1_ref[...], preferred_element_type=jnp.float32)
         + b1_ref[...])                                                            # (N, hbd)

    # proj partial product for this head block, accumulated across head blocks
    acc_ref[...] += jnp.dot(z.astype(cd), wp_ref[...],
                            preferred_element_type=jnp.float32)                    # (N, C)

    @pl.when(j == pl.num_programs(1) - 1)
    def _():
        o_ref[0] = (acc_ref[...] + bp_ref[...]).astype(o_ref.dtype)


def external_attention_forward(prep, x, *, dim, num_heads, coef=4):
    B, N, C = x.shape
    assert C == dim
    H = num_heads * coef
    D = dim * coef // H
    k = 256 // coef
    h_blk = prep["h_blk"]
    hbd = h_blk * D
    G = h_blk * k
    grid = (B, H // h_blk)   # B parallel (megacore), head-block axis is the proj reduction

    return pl.pallas_call(
        _fused_kernel,
        out_shape=jax.ShapeDtypeStruct((B, N, C), x.dtype),
        grid=grid,
        in_specs=[
            pl.BlockSpec((1, N, C), lambda b, j: (b, 0, 0)),   # x[b] (same block across j -> 1 DMA/b)
            pl.BlockSpec((C, hbd), lambda b, j: (0, j)),       # Wtrans^T columns of this head block
            pl.BlockSpec((1, hbd), lambda b, j: (0, j)),       # trans bias slice
            pl.BlockSpec((hbd, G), lambda b, j: (0, 0)),       # W0 block-diagonal (constant)
            pl.BlockSpec((1, G), lambda b, j: (0, 0)),         # b0 tiled (constant)
            pl.BlockSpec((G, h_blk), lambda b, j: (0, 0)),     # Pg  (k-group pooling, constant)
            pl.BlockSpec((h_blk, G), lambda b, j: (0, 0)),     # Pg^T (broadcast back, constant)
            pl.BlockSpec((G, hbd), lambda b, j: (0, 0)),       # W1 block-diagonal (constant)
            pl.BlockSpec((1, hbd), lambda b, j: (0, 0)),       # b1 tiled (constant)
            pl.BlockSpec((hbd, C), lambda b, j: (j, 0)),       # Wproj^T rows of this head block
            pl.BlockSpec((1, C), lambda b, j: (0, 0)),         # proj bias (constant)
        ],
        out_specs=pl.BlockSpec((1, N, C), lambda b, j: (b, 0, 0)),
        scratch_shapes=[pltpu.VMEM((N, C), jnp.float32)],
        compiler_params=pltpu.CompilerParams(
            dimension_semantics=("parallel", "arbitrary"),
            vmem_limit_bytes=_derive_vmem_limit(N, C, hbd, G, h_blk),
        ),
    )(x, prep["w_trans_t"], prep["b_trans_t"], prep["w0_bd"], prep["b0_t"],
      prep["pg"], prep["pg_t"], prep["w1_bd"], prep["b1_t"],
      prep["w_proj_t"], prep["b_proj_t"])


# ---------------------------------------------------------------------------
# Parameters (torch layout) + one-time preparation (pre-transpose / replicate)
# ---------------------------------------------------------------------------
def xavier_uniform(key, shape, dtype=jnp.float32):
    fan_out, fan_in = shape  # torch Linear weight is (out_features, in_features)
    bound = math.sqrt(6.0 / (fan_in + fan_out))
    return jax.random.uniform(key, shape, dtype, -bound, bound)


def init_raw_params(key, dim, num_heads, coef=4):
    H = num_heads * coef
    D = dim * coef // H
    k = 256 // coef
    ks = jax.random.split(key, 8)
    return {
        "trans_w": xavier_uniform(ks[0], (dim * coef, dim)),
        "trans_b": jax.random.normal(ks[1], (dim * coef,)) * 0.02,
        "l0_w": xavier_uniform(ks[2], (k, D)),
        "l0_b": jax.random.normal(ks[3], (k,)) * 0.02,
        "l1_w": xavier_uniform(ks[4], (D, k)),
        "l1_b": jax.random.normal(ks[5], (D,)) * 0.02,
        "proj_w": xavier_uniform(ks[6], (dim, dim * coef)),
        "proj_b": jax.random.normal(ks[7], (dim,)) * 0.02,
    }


def prepare_params(raw, dim, num_heads, coef=4, param_dtype=jnp.float32):
    """One-time prep: pre-transpose projection weights, build block-diagonal / pooling
    constants.  param_dtype=jnp.bfloat16 is the production choice on v6e/v7x (MXU bf16
    throughput + half the HBM/VMEM traffic); f32 keeps the strict self-test tolerance."""
    H = num_heads * coef
    D = dim * coef // H
    k = 256 // coef
    h_blk = _pick_head_block(H, D, k)
    G = h_blk * k
    pd = param_dtype
    eye = jnp.eye(h_blk, dtype=jnp.float32)
    pg = (jnp.arange(G)[:, None] // k == jnp.arange(h_blk)[None, :]).astype(jnp.float32)
    return {
        "h_blk": h_blk,
        "w_trans_t": raw["trans_w"].T.astype(pd),                            # (C, 4C)
        "b_trans_t": raw["trans_b"].reshape(1, -1).astype(pd),               # (1, 4C)
        "w0_bd": jnp.kron(eye, raw["l0_w"].T).astype(pd),                    # (h_blk*D, h_blk*k)
        "b0_t": jnp.tile(raw["l0_b"], h_blk).reshape(1, G).astype(pd),
        "w1_bd": jnp.kron(eye, raw["l1_w"].T).astype(pd),                    # (h_blk*k, h_blk*D)
        "b1_t": jnp.tile(raw["l1_b"], h_blk).reshape(1, h_blk * D).astype(pd),
        "pg": pg,                                                            # (G, h_blk)  keep f32
        "pg_t": pg.T,                                                        # (h_blk, G)  keep f32
        "w_proj_t": raw["proj_w"].T.astype(pd),                              # (4C, C)
        "b_proj_t": raw["proj_b"].reshape(1, -1).astype(pd),                 # (1, C)
    }


if __name__ == "__main__":
    dim, num_heads = 64, 8          # -> H = 32 heads, head_dim D = 8, k = 64, h_blk = 16
    B, N = 2, 16

    key = jax.random.PRNGKey(0)
    kp, kx = jax.random.split(key)
    raw = init_raw_params(kp, dim, num_heads)
    prep = prepare_params(raw, dim, num_heads)   # f32 for the strict check; bf16 for prod v6e/v7x

    x = jax.random.normal(kx, (B, N, dim), jnp.float32)

    out = external_attention_forward(prep, x, dim=dim, num_heads=num_heads)
    out = jax.block_until_ready(out)
    assert out.shape == (B, N, dim)

    # Pure-JAX reference mirroring the PyTorch module exactly (raw torch-layout weights).
    def reference(raw, x):
        coef = 4
        H = num_heads * coef
        D = dim * coef // H
        y = x @ raw["trans_w"].T + raw["trans_b"]                 # (B,N,4C)
        y = y.reshape(B, N, H, D).transpose(0, 2, 1, 3)           # (B,H,N,D)
        a = y @ raw["l0_w"].T + raw["l0_b"]                       # (B,H,N,k)
        a = jax.nn.softmax(a, axis=-2)                            # softmax over N
        a = a / (1e-9 + a.sum(axis=-1, keepdims=True))            # normalise over k
        z = a @ raw["l1_w"].T + raw["l1_b"]                       # (B,H,N,D)
        z = z.transpose(0, 2, 1, 3).reshape(B, N, H * D)
        return z @ raw["proj_w"].T + raw["proj_b"]

    out_ref = reference(raw, x)
    max_err = float(jnp.max(jnp.abs(out - out_ref)))
    assert jnp.allclose(out, out_ref, atol=5e-4, rtol=1e-4), max_err

    print("KERNEL_OK")
</pallas_src>

<mosaic_0001>
module attributes {stable_mosaic.version = 11 : i64} {
  func.func @_fused_kernel(%arg0: i32, %arg1: i32, %arg2: memref<1x16x64xf32, #tpu.memory_space<vmem>>, %arg3: memref<64x128xf32, #tpu.memory_space<vmem>>, %arg4: memref<1x128xf32, #tpu.memory_space<vmem>>, %arg5: memref<128x1024xf32, #tpu.memory_space<vmem>>, %arg6: memref<1x1024xf32, #tpu.memory_space<vmem>>, %arg7: memref<1024x16xf32, #tpu.memory_space<vmem>>, %arg8: memref<16x1024xf32, #tpu.memory_space<vmem>>, %arg9: memref<1024x128xf32, #tpu.memory_space<vmem>>, %arg10: memref<1x128xf32, #tpu.memory_space<vmem>>, %arg11: memref<128x64xf32, #tpu.memory_space<vmem>>, %arg12: memref<1x64xf32, #tpu.memory_space<vmem>>, %arg13: memref<1x16x64xf32, #tpu.memory_space<vmem>>, %arg14: memref<16x64xf32, #tpu.memory_space<vmem>>) attributes {dimension_semantics = [#tpu.dimension_semantics<parallel>, #tpu.dimension_semantics<arbitrary>], iteration_bounds = array<i64: 2, 2>, scalar_prefetch = 0 : i64, scratch_operands = 1 : i64, tpu.core_type = #tpu.core_type<tc>, window_params = [{transform_indices = @transform_0, window_bounds = array<i64: 1, 16, 64>}, {transform_indices = @transform_1, window_bounds = array<i64: 64, 128>}, {transform_indices = @transform_2, window_bounds = array<i64: 1, 128>}, {pipeline_mode = #tpu.pipeline_mode<synchronous>, transform_indices = @transform_3, window_bounds = array<i64: 128, 1024>}, {pipeline_mode = #tpu.pipeline_mode<synchronous>, transform_indices = @transform_4, window_bounds = array<i64: 1, 1024>}, {pipeline_mode = #tpu.pipeline_mode<synchronous>, transform_indices = @transform_5, window_bounds = array<i64: 1024, 16>}, {pipeline_mode = #tpu.pipeline_mode<synchronous>, transform_indices = @transform_6, window_bounds = array<i64: 16, 1024>}, {pipeline_mode = #tpu.pipeline_mode<synchronous>, transform_indices = @transform_7, window_bounds = array<i64: 1024, 128>}, {pipeline_mode = #tpu.pipeline_mode<synchronous>, transform_indices = @transform_8, window_bounds = array<i64: 1, 128>}, {transform_indices = @transform_9, window_bounds = array<i64: 128, 64>}, {pipeline_mode = #tpu.pipeline_mode<synchronous>, transform_indices = @transform_10, window_bounds = array<i64: 1, 64>}, {transform_indices = @transform_11, window_bounds = array<i64: 1, 16, 64>}]} {
    %c0_i32 = arith.constant 0 : i32
    %0 = arith.cmpi eq, %arg1, %c0_i32 : i32
    %1 = arith.extui %0 : i1 to i32
    %c0_i32_0 = arith.constant 0 : i32
    %2 = arith.cmpi ne, %1, %c0_i32_0 : i32
    scf.if %2 {
      %cst_34 = arith.constant 0.000000e+00 : f32
      %46 = vector.broadcast %cst_34 : f32 to vector<16x64xf32>
      %c0_35 = arith.constant 0 : index
      %c0_36 = arith.constant 0 : index
      %47 = vector.load %arg14[%c0_35, %c0_36] : memref<16x64xf32, #tpu.memory_space<vmem>>, vector<16x64xf32>
      tpu.vector_store %arg14[%c0_35, %c0_36], %46 {strides = array<i32>} : memref<16x64xf32, #tpu.memory_space<vmem>>, vector<16x64xf32>,
    } else {
    }
    %c0 = arith.constant 0 : index
    %c0_1 = arith.constant 0 : index
    %c0_2 = arith.constant 0 : index
    %3 = vector.load %arg2[%c0, %c0_1, %c0_2] : memref<1x16x64xf32, #tpu.memory_space<vmem>>, vector<1x16x64xf32>
    %4 = vector.shape_cast %3 : vector<1x16x64xf32> to vector<16x64xf32>
    %c0_3 = arith.constant 0 : index
    %c0_4 = arith.constant 0 : index
    %5 = vector.load %arg3[%c0_3, %c0_4] : memref<64x128xf32, #tpu.memory_space<vmem>>, vector<64x128xf32>
    %cst = arith.constant dense<0.000000e+00> : vector<16x128xf32>
    %6 = tpu.matmul %4, %5, %cst {dimension_numbers = #tpu.dot_dimension_numbers<[1], [0], [0], [1], [0, 0, 1, 1], [], []>} : vector<16x64xf32>, vector<64x128xf32>, vector<16x128xf32> -> vector<16x128xf32>
    %c0_5 = arith.constant 0 : index
    %c0_6 = arith.constant 0 : index
    %7 = vector.load %arg4[%c0_5, %c0_6] : memref<1x128xf32, #tpu.memory_space<vmem>>, vector<1x128xf32>
    %8 = vector.broadcast %7 : vector<1x128xf32> to vector<16x128xf32>
    %9 = arith.addf %6, %8 : vector<16x128xf32>
    %c0_7 = arith.constant 0 : index
    %c0_8 = arith.constant 0 : index
    %10 = vector.load %arg5[%c0_7, %c0_8] : memref<128x1024xf32, #tpu.memory_space<vmem>>, vector<128x1024xf32>
    %cst_9 = arith.constant dense<0.000000e+00> : vector<16x1024xf32>
    %11 = tpu.matmul %9, %10, %cst_9 {dimension_numbers = #tpu.dot_dimension_numbers<[1], [0], [0], [1], [0, 0, 1, 1], [], []>} : vector<16x128xf32>, vector<128x1024xf32>, vector<16x1024xf32> -> vector<16x1024xf32>
    %c0_10 = arith.constant 0 : index
    %c0_11 = arith.constant 0 : index
    %12 = vector.load %arg6[%c0_10, %c0_11] : memref<1x1024xf32, #tpu.memory_space<vmem>>, vector<1x1024xf32>
    %13 = vector.broadcast %12 : vector<1x1024xf32> to vector<16x1024xf32>
    %14 = arith.addf %11, %13 : vector<16x1024xf32>
    %cst_12 = arith.constant dense<0xFF800000> : vector<1024xf32>
    %15 = vector.multi_reduction <maximumf>, %14, %cst_12 [0] : vector<16x1024xf32> to vector<1024xf32>
    %16 = vector.shape_cast %15 : vector<1024xf32> to vector<1x1024xf32>
    %17 = vector.broadcast %16 : vector<1x1024xf32> to vector<16x1024xf32>
    %18 = arith.subf %14, %17 : vector<16x1024xf32>
    %19 = math.exp %18 : vector<16x1024xf32>
    %cst_13 = arith.constant dense<0.000000e+00> : vector<1024xf32>
    %20 = vector.multi_reduction <add>, %19, %cst_13 [0] : vector<16x1024xf32> to vector<1024xf32>
    %21 = vector.shape_cast %20 : vector<1024xf32> to vector<1x1024xf32>
    %22 = tpu.reciprocal %21 : vector<1x1024xf32> -> vector<1x1024xf32>
    %23 = vector.broadcast %22 : vector<1x1024xf32> to vector<16x1024xf32>
    %24 = arith.mulf %19, %23 : vector<16x1024xf32>
    %c0_14 = arith.constant 0 : index
    %c0_15 = arith.constant 0 : index
    %25 = vector.load %arg7[%c0_14, %c0_15] : memref<1024x16xf32, #tpu.memory_space<vmem>>, vector<1024x16xf32>
    %cst_16 = arith.constant dense<0.000000e+00> : vector<16x16xf32>
    %26 = tpu.matmul %24, %25, %cst_16 {dimension_numbers = #tpu.dot_dimension_numbers<[1], [0], [0], [1], [0, 0, 1, 1], [], []>} : vector<16x1024xf32>, vector<1024x16xf32>, vector<16x16xf32> -> vector<16x16xf32>
    %cst_17 = arith.constant 9.99999971E-10 : f32
    %27 = vector.broadcast %cst_17 : f32 to vector<16x16xf32>
    %28 = arith.addf %27, %26 : vector<16x16xf32>
    %29 = tpu.reciprocal %28 : vector<16x16xf32> -> vector<16x16xf32>
    %c0_18 = arith.constant 0 : index
    %c0_19 = arith.constant 0 : index
    %30 = vector.load %arg8[%c0_18, %c0_19] : memref<16x1024xf32, #tpu.memory_space<vmem>>, vector<16x1024xf32>
    %cst_20 = arith.constant dense<0.000000e+00> : vector<16x1024xf32>
    %31 = tpu.matmul %29, %30, %cst_20 {dimension_numbers = #tpu.dot_dimension_numbers<[1], [0], [0], [1], [0, 0, 1, 1], [], []>} : vector<16x16xf32>, vector<16x1024xf32>, vector<16x1024xf32> -> vector<16x1024xf32>
    %32 = arith.mulf %24, %31 : vector<16x1024xf32>
    %c0_21 = arith.constant 0 : index
    %c0_22 = arith.constant 0 : index
    %33 = vector.load %arg9[%c0_21, %c0_22] : memref<1024x128xf32, #tpu.memory_space<vmem>>, vector<1024x128xf32>
    %cst_23 = arith.constant dense<0.000000e+00> : vector<16x128xf32>
    %34 = tpu.matmul %32, %33, %cst_23 {dimension_numbers = #tpu.dot_dimension_numbers<[1], [0], [0], [1], [0, 0, 1, 1], [], []>} : vector<16x1024xf32>, vector<1024x128xf32>, vector<16x128xf32> -> vector<16x128xf32>
    %c0_24 = arith.constant 0 : index
    %c0_25 = arith.constant 0 : index
    %35 = vector.load %arg10[%c0_24, %c0_25] : memref<1x128xf32, #tpu.memory_space<vmem>>, vector<1x128xf32>
    %36 = vector.broadcast %35 : vector<1x128xf32> to vector<16x128xf32>
    %37 = arith.addf %34, %36 : vector<16x128xf32>
    %c0_26 = arith.constant 0 : index
    %c0_27 = arith.constant 0 : index
    %38 = vector.load %arg14[%c0_26, %c0_27] : memref<16x64xf32, #tpu.memory_space<vmem>>, vector<16x64xf32>
    %c0_28 = arith.constant 0 : index
    %c0_29 = arith.constant 0 : index
    %39 = vector.load %arg11[%c0_28, %c0_29] : memref<128x64xf32, #tpu.memory_space<vmem>>, vector<128x64xf32>
    %cst_30 = arith.constant dense<0.000000e+00> : vector<16x64xf32>
    %40 = tpu.matmul %37, %39, %cst_30 {dimension_numbers = #tpu.dot_dimension_numbers<[1], [0], [0], [1], [0, 0, 1, 1], [], []>} : vector<16x128xf32>, vector<128x64xf32>, vector<16x64xf32> -> vector<16x64xf32>
    %41 = arith.addf %38, %40 : vector<16x64xf32>
    %c0_31 = arith.constant 0 : index
    %c0_32 = arith.constant 0 : index
    %42 = vector.load %arg14[%c0_31, %c0_32] : memref<16x64xf32, #tpu.memory_space<vmem>>, vector<16x64xf32>
    tpu.vector_store %arg14[%c0_31, %c0_32], %41 {strides = array<i32>} : memref<16x64xf32, #tpu.memory_space<vmem>>, vector<16x64xf32>,
    %c1_i32 = arith.constant 1 : i32
    %43 = arith.cmpi eq, %arg1, %c1_i32 : i32
    %44 = arith.extui %43 : i1 to i32
    %c0_i32_33 = arith.constant 0 : i32
    %45 = arith.cmpi ne, %44, %c0_i32_33 : i32
    scf.if %45 {
      %c0_34 = arith.constant 0 : index
      %c0_35 = arith.constant 0 : index
      %46 = vector.load %arg14[%c0_34, %c0_35] : memref<16x64xf32, #tpu.memory_space<vmem>>, vector<16x64xf32>
      %c0_36 = arith.constant 0 : index
      %c0_37 = arith.constant 0 : index
      %47 = vector.load %arg12[%c0_36, %c0_37] : memref<1x64xf32, #tpu.memory_space<vmem>>, vector<1x64xf32>
      %48 = vector.broadcast %47 : vector<1x64xf32> to vector<16x64xf32>
      %49 = arith.addf %46, %48 : vector<16x64xf32>
      %c0_38 = arith.constant 0 : index
      %c0_39 = arith.constant 0 : index
      %c0_40 = arith.constant 0 : index
      %50 = vector.load %arg13[%c0_38, %c0_39, %c0_40] : memref<1x16x64xf32, #tpu.memory_space<vmem>>, vector<1x16x64xf32>
      %51 = vector.shape_cast %50 : vector<1x16x64xf32> to vector<16x64xf32>
      %52 = vector.shape_cast %49 : vector<16x64xf32> to vector<1x16x64xf32>
      tpu.vector_store %arg13[%c0_38, %c0_39, %c0_40], %52 {strides = array<i32>} : memref<1x16x64xf32, #tpu.memory_space<vmem>>, vector<1x16x64xf32>,
    } else {
    }
    return
  }
  func.func @transform_0(%arg0: i32, %arg1: i32) -> (i32, i32, i32) {
    %c0_i32 = arith.constant 0 : i32
    %c0_i32_0 = arith.constant 0 : i32
    %c0_i32_1 = arith.constant 0 : i32
    return %arg0, %c0_i32, %c0_i32_0 : i32, i32, i32
  }
  func.func @transform_1(%arg0: i32, %arg1: i32) -> (i32, i32) {
    %c0_i32 = arith.constant 0 : i32
    %c0_i32_0 = arith.constant 0 : i32
    return %c0_i32, %arg1 : i32, i32
  }
  func.func @transform_2(%arg0: i32, %arg1: i32) -> (i32, i32) {
    %c0_i32 = arith.constant 0 : i32
    %c0_i32_0 = arith.constant 0 : i32
    return %c0_i32, %arg1 : i32, i32
  }
  func.func @transform_3(%arg0: i32, %arg1: i32) -> (i32, i32) {
    %c0_i32 = arith.constant 0 : i32
    %c0_i32_0 = arith.constant 0 : i32
    %c0_i32_1 = arith.constant 0 : i32
    return %c0_i32, %c0_i32_0 : i32, i32
  }
  func.func @transform_4(%arg0: i32, %arg1: i32) -> (i32, i32) {
    %c0_i32 = arith.constant 0 : i32
    %c0_i32_0 = arith.constant 0 : i32
    %c0_i32_1 = arith.constant 0 : i32
    return %c0_i32, %c0_i32_0 : i32, i32
  }
  func.func @transform_5(%arg0: i32, %arg1: i32) -> (i32, i32) {
    %c0_i32 = arith.constant 0 : i32
    %c0_i32_0 = arith.constant 0 : i32
    %c0_i32_1 = arith.constant 0 : i32
    return %c0_i32, %c0_i32_0 : i32, i32
  }
  func.func @transform_6(%arg0: i32, %arg1: i32) -> (i32, i32) {
    %c0_i32 = arith.constant 0 : i32
    %c0_i32_0 = arith.constant 0 : i32
    %c0_i32_1 = arith.constant 0 : i32
    return %c0_i32, %c0_i32_0 : i32, i32
  }
  func.func @transform_7(%arg0: i32, %arg1: i32) -> (i32, i32) {
    %c0_i32 = arith.constant 0 : i32
    %c0_i32_0 = arith.constant 0 : i32
    %c0_i32_1 = arith.constant 0 : i32
    return %c0_i32, %c0_i32_0 : i32, i32
  }
  func.func @transform_8(%arg0: i32, %arg1: i32) -> (i32, i32) {
    %c0_i32 = arith.constant 0 : i32
    %c0_i32_0 = arith.constant 0 : i32
    %c0_i32_1 = arith.constant 0 : i32
    return %c0_i32, %c0_i32_0 : i32, i32
  }
  func.func @transform_9(%arg0: i32, %arg1: i32) -> (i32, i32) {
    %c0_i32 = arith.constant 0 : i32
    %c0_i32_0 = arith.constant 0 : i32
    return %arg1, %c0_i32 : i32, i32
  }
  func.func @transform_10(%arg0: i32, %arg1: i32) -> (i32, i32) {
    %c0_i32 = arith.constant 0 : i32
    %c0_i32_0 = arith.constant 0 : i32
    %c0_i32_1 = arith.constant 0 : i32
    return %c0_i32, %c0_i32_0 : i32, i32
  }
  func.func @transform_11(%arg0: i32, %arg1: i32) -> (i32, i32, i32) {
    %c0_i32 = arith.constant 0 : i32
    %c0_i32_0 = arith.constant 0 : i32
    %c0_i32_1 = arith.constant 0 : i32
    return %arg0, %c0_i32, %c0_i32_0 : i32, i32, i32
  }
}

</mosaic_0001>

<llo_original>
// kernel: tpu_custom_call.1
$region0: #{tpu_custom_call.1}
  #allocation0 [shape = 'u32[]', space=smem, size = 0x4, offset = 0x4, fixed_abs, tag = 'smem constant byte address 0x4 - core index']
  #allocation1 [shape = 'u32[72,128]{1,0:T(1,128)}', space=vmem, size = 0x9000, scoped, tag = 'internal scratch']
  #allocation2 [shape = 'f32[16,64]{1,0:T(8,128)}', space=vmem, size = 0x2000, scoped, tag = 'scratch operand']
  %s0 = inlined_call_operand.vmem [shape: f32[2,16,64], index: 0, kind: input, shape index: {}]
  %s1 = inlined_call_operand.vmem [shape: f32[64,256], index: 1, kind: input, shape index: {}]
  %s2 = inlined_call_operand.vmem [shape: f32[1,256], index: 2, kind: input, shape index: {}]
  %s3 = inlined_call_operand.vmem [shape: f32[128,1024], index: 3, kind: input, shape index: {}]
  %s4 = inlined_call_operand.vmem [shape: f32[1,1024], index: 4, kind: input, shape index: {}]
  %s5 = inlined_call_operand.vmem [shape: f32[1024,16], index: 5, kind: input, shape index: {}]
  %s6 = inlined_call_operand.vmem [shape: f32[16,1024], index: 6, kind: input, shape index: {}]
  %s7 = inlined_call_operand.hbm [shape: f32[1024,128], index: 7, kind: input, shape index: {}]
  %s8 = inlined_call_operand.vmem [shape: f32[1,128], index: 8, kind: input, shape index: {}]
  %s9 = inlined_call_operand.vmem [shape: f32[256,64], index: 9, kind: input, shape index: {}]
  %s10 = inlined_call_operand.vmem [shape: f32[1,64], index: 10, kind: input, shape index: {}]
  %s11 = inlined_call_operand.hbm [shape: f32[2,16,64], index: 11, kind: output, shape index: {}]
  %s12 = sld [smem:[#allocation0]]
  $region127: #{tpu_custom_call.1} parent=0
    _
  %s14 = ssub.s32 1, %s12
  %s15 = scalar_select 0, %s14, %s12
  $region1: #{tpu_custom_call.1} parent=0
    #allocation3 [shape = 'u8[65536]{0}', space=vmem, size = 0x10000, scoped, tag = 'input window, operand 1']
    #allocation4 [shape = 'u8[524288]{0}', space=vmem, size = 0x80000, scoped, tag = 'input window, operand 7, single buffered']
    #allocation5 [shape = 's32[2]{0}', space=sflag, size = 0x8, scoped, tag = 'scoped memory for tpu_custom_call.1']
    #allocation6 [shape = 's32[2]{0}', space=sflag, size = 0x8, scoped, tag = 'scoped memory for tpu_custom_call.1']
    #allocation7 [shape = 'u8[16384]{0}', space=vmem, size = 0x4000, scoped, tag = 'output window, operand 0']
    %16 = vsyncpa [#allocation5], 0
    %17 = vsyncpa [#allocation6], 0
    %s18 = scalar_lea.sflag [#allocation6], 1
    %19 = vsyncpa %s18, 0
    loop: start=0, step=1, limit=6
    $region2: #{tpu_custom_call.1} parent=1 // loop_pre_header
      _
    $region3: #{tpu_custom_call.1} parent=1 // loop_header
      %s21 = sphi 0, %s25
      %p22 = scmp.ge.s32.totalorder %s21, 6
      %s28 = sphi 0, %s40
      %s29 = sphi 0, %s36
      %s30 = sphi 0, %s28
      %s31 = sphi 0, %s29
      %s32 = sphi 0, %s30
      %s33 = sphi 0, %s31
      %s43 = sphi 0, %s45
      %s46 = sphi 0, %s43
      %s47 = sphi 0, %s46
      %s63 = sphi 0, %s47
      %s69 = sphi 0, %s71
      %s72 = sphi 0, %s69
      %s73 = sphi 0, %s72
      %s89 = sphi 0, %s73
      %s95 = sphi 0, %s97
      %s98 = sphi 0, %s95
      %s99 = sphi 0, %s98
      %s115 = sphi 0, %s99
      %s119 = sphi 0, %s119
      %s121 = sphi 0, %s119
      %s122 = sphi 0, %s121
      %s136 = sphi 0, %s122
      %s140 = sphi 0, %s140
      %s142 = sphi 0, %s140
      %s143 = sphi 0, %s142
      %s157 = sphi 0, %s143
      %s161 = sphi 0, %s161
      %s163 = sphi 0, %s161
      %s164 = sphi 0, %s163
      %s178 = sphi 0, %s164
      %s182 = sphi 0, %s182
      %s184 = sphi 0, %s182
      %s185 = sphi 0, %s184
      %s199 = sphi 0, %s185
      %s203 = sphi 0, %s203
      %s205 = sphi 0, %s203
      %s206 = sphi 0, %s205
      %s220 = sphi 0, %s206
      %s224 = sphi 0, %s224
      %s226 = sphi 0, %s224
      %s227 = sphi 0, %s226
      %s241 = sphi 0, %s227
      %s247 = sphi 0, %s249
      %s250 = sphi 0, %s247
      %s251 = sphi 0, %s250
      %s267 = sphi 0, %s251
      %s271 = sphi 0, %s271
      %s273 = sphi 0, %s271
      %s274 = sphi 0, %s273
      %s288 = sphi 0, %s274
      %s294 = sphi 0, %s296
      %s297 = sphi 0, %s294
      %s298 = sphi 0, %s297
      %s314 = sphi 0, %s298
    $region4: #{tpu_custom_call.1} parent=1 // loop_header_branch
      %24 = sbr.rel (%p22) target = $region8
    $region5: #{tpu_custom_call.1} parent=1 // loop_body
      %s26 = ssub.s32 %s21, 1
      %s27 = ssub.s32 %s21, 2
      %s34 = sadd.s32 1, %s29
      %p35 = scmp.ge.s32.totalorder %s34, 2
      %s36 = scalar_select %p35, 0, %s34
      %s37 = sadd.s32 1, %s28
      %s38 = scalar_select %p35, %s37, %s28
      %p39 = scmp.ge.s32.totalorder %s38, 2
      %s40 = scalar_select %p39, 0, %s38
      %s41 = ssub.s32 %s28, %s40
      %p42 = scmp.eq.s32.totalorder %s41, 0
      %s44 = sadd.s32 %s43, 1
      %s45 = scalar_select %p42, %s43, %s44
      %p48 = pneg %p42
      %p49 = scmp.eq.s32.totalorder %s21, 3
      %p50 = por %p48, %p49
      %p51 = scmp.ne.s32.totalorder %s43, %s46
      %p52 = scmp.eq.s32.totalorder %s21, 0
      %p53 = por %p51, %p52
      %p54 = scmp.ne.s32.totalorder %s43, %s46
      %p55 = scmp.eq.s32.totalorder %s26, 3
      %p56 = por %p54, %p55
      %p57 = scmp.ne.s32.totalorder %s46, %s47
      %p58 = scmp.eq.s32.totalorder %s26, 0
      %p59 = por %p57, %p58
      %p60 = scmp.ne.s32.totalorder %s46, %s47
      %p61 = scmp.eq.s32.totalorder %s27, 3
      %p62 = por %p60, %p61
      %p64 = scmp.ne.s32.totalorder %s47, %s63
      %p65 = scmp.eq.s32.totalorder %s27, 0
      %p66 = por %p64, %p65
      %s67 = ssub.s32 %s29, %s36
      %p68 = scmp.eq.s32.totalorder %s67, 0
      %s70 = sadd.s32 %s69, 1
      %s71 = scalar_select %p68, %s69, %s70
      %p74 = pneg %p68
      %p75 = scmp.eq.s32.totalorder %s21, 3
      %p76 = por %p74, %p75
      %p77 = scmp.ne.s32.totalorder %s69, %s72
      %p78 = scmp.eq.s32.totalorder %s21, 0
      %p79 = por %p77, %p78
      %p80 = scmp.ne.s32.totalorder %s69, %s72
      %p81 = scmp.eq.s32.totalorder %s26, 3
      %p82 = por %p80, %p81
      %p83 = scmp.ne.s32.totalorder %s72, %s73
      %p84 = scmp.eq.s32.totalorder %s26, 0
      %p85 = por %p83, %p84
      %p86 = scmp.ne.s32.totalorder %s72, %s73
      %p87 = scmp.eq.s32.totalorder %s27, 3
      %p88 = por %p86, %p87
      %p90 = scmp.ne.s32.totalorder %s73, %s89
      %p91 = scmp.eq.s32.totalorder %s27, 0
      %p92 = por %p90, %p91
      %s93 = ssub.s32 %s29, %s36
      %p94 = scmp.eq.s32.totalorder %s93, 0
      %s96 = sadd.s32 %s95, 1
      %s97 = scalar_select %p94, %s95, %s96
      %p100 = pneg %p94
      %p101 = scmp.eq.s32.totalorder %s21, 3
      %p102 = por %p100, %p101
      %p103 = scmp.ne.s32.totalorder %s95, %s98
      %p104 = scmp.eq.s32.totalorder %s21, 0
      %p105 = por %p103, %p104
      %p106 = scmp.ne.s32.totalorder %s95, %s98
      %p107 = scmp.eq.s32.totalorder %s26, 3
      %p108 = por %p106, %p107
      %p109 = scmp.ne.s32.totalorder %s98, %s99
      %p110 = scmp.eq.s32.totalorder %s26, 0
      %p111 = por %p109, %p110
      %p112 = scmp.ne.s32.totalorder %s98, %s99
      %p113 = scmp.eq.s32.totalorder %s27, 3
      %p114 = por %p112, %p113
      %p116 = scmp.ne.s32.totalorder %s99, %s115
      %p117 = scmp.eq.s32.totalorder %s27, 0
      %p118 = por %p116, %p117
      %s120 = sadd.s32 %s119, 1
      %p123 = scmp.eq.s32.totalorder %s21, 3
      %p124 = scmp.ne.s32.totalorder %s119, %s121
      %p125 = scmp.eq.s32.totalorder %s21, 0
      %p126 = por %p124, %p125
      %p127 = scmp.ne.s32.totalorder %s119, %s121
      %p128 = scmp.eq.s32.totalorder %s26, 3
      %p129 = por %p127, %p128
      %p130 = scmp.ne.s32.totalorder %s121, %s122
      %p131 = scmp.eq.s32.totalorder %s26, 0
      %p132 = por %p130, %p131
      %p133 = scmp.ne.s32.totalorder %s121, %s122
      %p134 = scmp.eq.s32.totalorder %s27, 3
      %p135 = por %p133, %p134
      %p137 = scmp.ne.s32.totalorder %s122, %s136
      %p138 = scmp.eq.s32.totalorder %s27, 0
      %p139 = por %p137, %p138
      %s141 = sadd.s32 %s140, 1
      %p144 = scmp.eq.s32.totalorder %s21, 3
      %p145 = scmp.ne.s32.totalorder %s140, %s142
      %p146 = scmp.eq.s32.totalorder %s21, 0
      %p147 = por %p145, %p146
      %p148 = scmp.ne.s32.totalorder %s140, %s142
      %p149 = scmp.eq.s32.totalorder %s26, 3
      %p150 = por %p148, %p149
      %p151 = scmp.ne.s32.totalorder %s142, %s143
      %p152 = scmp.eq.s32.totalorder %s26, 0
      %p153 = por %p151, %p152
      %p154 = scmp.ne.s32.totalorder %s142, %s143
      %p155 = scmp.eq.s32.totalorder %s27, 3
      %p156 = por %p154, %p155
      %p158 = scmp.ne.s32.totalorder %s143, %s157
      %p159 = scmp.eq.s32.totalorder %s27, 0
      %p160 = por %p158, %p159
      %s162 = sadd.s32 %s161, 1
      %p165 = scmp.eq.s32.totalorder %s21, 3
      %p166 = scmp.ne.s32.totalorder %s161, %s163
      %p167 = scmp.eq.s32.totalorder %s21, 0
      %p168 = por %p166, %p167
      %p169 = scmp.ne.s32.totalorder %s161, %s163
      %p170 = scmp.eq.s32.totalorder %s26, 3
      %p171 = por %p169, %p170
      %p172 = scmp.ne.s32.totalorder %s163, %s164
      %p173 = scmp.eq.s32.totalorder %s26, 0
      %p174 = por %p172, %p173
      %p175 = scmp.ne.s32.totalorder %s163, %s164
      %p176 = scmp.eq.s32.totalorder %s27, 3
      %p177 = por %p175, %p176
      %p179 = scmp.ne.s32.totalorder %s164, %s178
      %p180 = scmp.eq.s32.totalorder %s27, 0
      %p181 = por %p179, %p180
      %s183 = sadd.s32 %s182, 1
      %p186 = scmp.eq.s32.totalorder %s21, 3
      %p187 = scmp.ne.s32.totalorder %s182, %s184
      %p188 = scmp.eq.s32.totalorder %s21, 0
      %p189 = por %p187, %p188
      %p190 = scmp.ne.s32.totalorder %s182, %s184
      %p191 = scmp.eq.s32.totalorder %s26, 3
      %p192 = por %p190, %p191
      %p193 = scmp.ne.s32.totalorder %s184, %s185
      %p194 = scmp.eq.s32.totalorder %s26, 0
      %p195 = por %p193, %p194
      %p196 = scmp.ne.s32.totalorder %s184, %s185
      %p197 = scmp.eq.s32.totalorder %s27, 3
      %p198 = por %p196, %p197
      %p200 = scmp.ne.s32.totalorder %s185, %s199
      %p201 = scmp.eq.s32.totalorder %s27, 0
      %p202 = por %p200, %p201
      %s204 = sadd.s32 %s203, 1
      %p207 = scmp.eq.s32.totalorder %s21, 3
      %p208 = scmp.ne.s32.totalorder %s203, %s205
      %p209 = scmp.eq.s32.totalorder %s21, 0
      %p210 = por %p208, %p209
      %p211 = scmp.ne.s32.totalorder %s203, %s205
      %p212 = scmp.eq.s32.totalorder %s26, 3
      %p213 = por %p211, %p212
      %p214 = scmp.ne.s32.totalorder %s205, %s206
      %p215 = scmp.eq.s32.totalorder %s26, 0
      %p216 = por %p214, %p215
      %p217 = scmp.ne.s32.totalorder %s205, %s206
      %p218 = scmp.eq.s32.totalorder %s27, 3
      %p219 = por %p217, %p218
      %p221 = scmp.ne.s32.totalorder %s206, %s220
      %p222 = scmp.eq.s32.totalorder %s27, 0
      %p223 = por %p221, %p222
      %s225 = sadd.s32 %s224, 1
      %p228 = scmp.eq.s32.totalorder %s21, 3
      %p229 = scmp.ne.s32.totalorder %s224, %s226
      %p230 = scmp.eq.s32.totalorder %s21, 0
      %p231 = por %p229, %p230
      %p232 = scmp.ne.s32.totalorder %s224, %s226
      %p233 = scmp.eq.s32.totalorder %s26, 3
      %p234 = por %p232, %p233
      %p235 = scmp.ne.s32.totalorder %s226, %s227
      %p236 = scmp.eq.s32.totalorder %s26, 0
      %p237 = por %p235, %p236
      %p238 = scmp.ne.s32.totalorder %s226, %s227
      %p239 = scmp.eq.s32.totalorder %s27, 3
      %p240 = por %p238, %p239
      %p242 = scmp.ne.s32.totalorder %s227, %s241
      %p243 = scmp.eq.s32.totalorder %s27, 0
      %p244 = por %p242, %p243
      %s245 = ssub.s32 %s29, %s36
      %p246 = scmp.eq.s32.totalorder %s245, 0
      %s248 = sadd.s32 %s247, 1
      %s249 = scalar_select %p246, %s247, %s248
      %p252 = pneg %p246
      %p253 = scmp.eq.s32.totalorder %s21, 3
      %p254 = por %p252, %p253
      %p255 = scmp.ne.s32.totalorder %s247, %s250
      %p256 = scmp.eq.s32.totalorder %s21, 0
      %p257 = por %p255, %p256
      %p258 = scmp.ne.s32.totalorder %s247, %s250
      %p259 = scmp.eq.s32.totalorder %s26, 3
      %p260 = por %p258, %p259
      %p261 = scmp.ne.s32.totalorder %s250, %s251
      %p262 = scmp.eq.s32.totalorder %s26, 0
      %p263 = por %p261, %p262
      %p264 = scmp.ne.s32.totalorder %s250, %s251
      %p265 = scmp.eq.s32.totalorder %s27, 3
      %p266 = por %p264, %p265
      %p268 = scmp.ne.s32.totalorder %s251, %s267
      %p269 = scmp.eq.s32.totalorder %s27, 0
      %p270 = por %p268, %p269
      %s272 = sadd.s32 %s271, 1
      %p275 = scmp.eq.s32.totalorder %s21, 3
      %p276 = scmp.ne.s32.totalorder %s271, %s273
      %p277 = scmp.eq.s32.totalorder %s21, 0
      %p278 = por %p276, %p277
      %p279 = scmp.ne.s32.totalorder %s271, %s273
      %p280 = scmp.eq.s32.totalorder %s26, 3
      %p281 = por %p279, %p280
      %p282 = scmp.ne.s32.totalorder %s273, %s274
      %p283 = scmp.eq.s32.totalorder %s26, 0
      %p284 = por %p282, %p283
      %p285 = scmp.ne.s32.totalorder %s273, %s274
      %p286 = scmp.eq.s32.totalorder %s27, 3
      %p287 = por %p285, %p286
      %p289 = scmp.ne.s32.totalorder %s274, %s288
      %p290 = scmp.eq.s32.totalorder %s27, 0
      %p291 = por %p289, %p290
      %s292 = ssub.s32 %s28, %s40
      %p293 = scmp.eq.s32.totalorder %s292, 0
      %s295 = sadd.s32 %s294, 1
      %s296 = scalar_select %p293, %s294, %s295
      %p299 = pneg %p293
      %p300 = scmp.eq.s32.totalorder %s21, 3
      %p301 = por %p299, %p300
      %p302 = scmp.ne.s32.totalorder %s294, %s297
      %p303 = scmp.eq.s32.totalorder %s21, 0
      %p304 = por %p302, %p303
      %p305 = scmp.ne.s32.totalorder %s294, %s297
      %p306 = scmp.eq.s32.totalorder %s26, 3
      %p307 = por %p305, %p306
      %p308 = scmp.ne.s32.totalorder %s297, %s298
      %p309 = scmp.eq.s32.totalorder %s26, 0
      %p310 = por %p308, %p309
      %p311 = scmp.ne.s32.totalorder %s297, %s298
      %p312 = scmp.eq.s32.totalorder %s27, 3
      %p313 = por %p311, %p312
      %p315 = scmp.ne.s32.totalorder %s298, %s314
      %p316 = scmp.eq.s32.totalorder %s27, 0
      %p317 = por %p315, %p316
      %p318 = scmp.le.s32.totalorder 1, %s21
      %p319 = scmp.lt.s32.totalorder %s21, 5
      %p320 = pnand %p318, %p319
      %p321 = pneg %p320
      // Predicated region
      $region9: #{tpu_custom_call.1} parent=5 // pred_check
        _
      $region10: #{tpu_custom_call.1} parent=5 // pred_check_branch
        %323 = sbr.rel (%p320) target = $region12
      $region11: #{tpu_custom_call.1} parent=5 // pred_region
        %s324 = ssub.s32 %s21, 1
        // Predicated region
        $region13: #{tpu_custom_call.1} parent=11 // pred_check
          %p325 = pneg %p132
        $region14: #{tpu_custom_call.1} parent=11 // pred_check_branch
          %327 = sbr.rel (%p325) target = $region16
        $region15: #{tpu_custom_call.1} parent=11 // pred_region
          _
        $region16: #{tpu_custom_call.1} parent=11 // pred_fallthru
          _
        // Predicated region
        $region17: #{tpu_custom_call.1} parent=11 // pred_check
          %p328 = pneg %p153
        $region18: #{tpu_custom_call.1} parent=11 // pred_check_branch
          %330 = sbr.rel (%p328) target = $region20
        $region19: #{tpu_custom_call.1} parent=11 // pred_region
          _
        $region20: #{tpu_custom_call.1} parent=11 // pred_fallthru
          _
        // Predicated region
        $region21: #{tpu_custom_call.1} parent=11 // pred_check
          %p331 = pneg %p174
        $region22: #{tpu_custom_call.1} parent=11 // pred_check_branch
          %333 = sbr.rel (%p331) target = $region24
        $region23: #{tpu_custom_call.1} parent=11 // pred_region
          _
        $region24: #{tpu_custom_call.1} parent=11 // pred_fallthru
          _
        // Predicated region
        $region25: #{tpu_custom_call.1} parent=11 // pred_check
          %p334 = pneg %p195
        $region26: #{tpu_custom_call.1} parent=11 // pred_check_branch
          %336 = sbr.rel (%p334) target = $region28
        $region27: #{tpu_custom_call.1} parent=11 // pred_region
          _
        $region28: #{tpu_custom_call.1} parent=11 // pred_fallthru
          _
        // Predicated region
        $region29: #{tpu_custom_call.1} parent=11 // pred_check
          %p337 = pneg %p216
        $region30: #{tpu_custom_call.1} parent=11 // pred_check_branch
          %339 = sbr.rel (%p337) target = $region32
        $region31: #{tpu_custom_call.1} parent=11 // pred_region
          %341 = vsyncadd [#allocation5], 0
          %s342 = sshll.u32 %s7, 4
          %s343 = int_to_ptr.hbm [resolvable:$true] %s342
          %s344 = sshll.u32 [#allocation4], 4
          %s345 = int_to_ptr.vmem [resolvable:$true] %s344
          %350 = dma.hbm_to_vmem [thread:$0]  %s343, 16384, %s345, [#allocation5], 128, 128, 8
        $region32: #{tpu_custom_call.1} parent=11 // pred_fallthru
          _
        // Predicated region
        $region33: #{tpu_custom_call.1} parent=11 // pred_check
          %p351 = pneg %p237
        $region34: #{tpu_custom_call.1} parent=11 // pred_check_branch
          %353 = sbr.rel (%p351) target = $region36
        $region35: #{tpu_custom_call.1} parent=11 // pred_region
          _
        $region36: #{tpu_custom_call.1} parent=11 // pred_fallthru
          _
        // Predicated region
        $region37: #{tpu_custom_call.1} parent=11 // pred_check
          %p354 = pneg %p284
        $region38: #{tpu_custom_call.1} parent=11 // pred_check_branch
          %356 = sbr.rel (%p354) target = $region40
        $region39: #{tpu_custom_call.1} parent=11 // pred_region
          _
        $region40: #{tpu_custom_call.1} parent=11 // pred_fallthru
          _
      $region12: #{tpu_custom_call.1} parent=5 // pred_fallthru
        _
      %p357 = scmp.lt.s32.totalorder %s21, 4
      // Predicated region
      $region41: #{tpu_custom_call.1} parent=5 // pred_check
        %p358 = pneg %p357
      $region42: #{tpu_custom_call.1} parent=5 // pred_check_branch
        %360 = sbr.rel (%p358) target = $region44
      $region43: #{tpu_custom_call.1} parent=5 // pred_region
        // Predicated region
        $region45: #{tpu_custom_call.1} parent=43 // pred_check
          %p361 = pneg %p53
        $region46: #{tpu_custom_call.1} parent=43 // pred_check_branch
          %363 = sbr.rel (%p361) target = $region48
        $region47: #{tpu_custom_call.1} parent=43 // pred_region
          %p364 = scmp.lt.s32.totalorder %s28, 1
          %s365 = scalar_select %p364, %s28, 1
          %s366 = smul.addr %s365, 2
          %s367 = smul.addr %s366, 8
          %s368 = scalar_lea.vmem %s0, %s367
        $region48: #{tpu_custom_call.1} parent=43 // pred_fallthru
          _
        // Predicated region
        $region49: #{tpu_custom_call.1} parent=43 // pred_check
          %p369 = pneg %p79
        $region50: #{tpu_custom_call.1} parent=43 // pred_check_branch
          %371 = sbr.rel (%p369) target = $region52
        $region51: #{tpu_custom_call.1} parent=43 // pred_region
          %s372 = sand.u32 %s69, 1
          %s373 = sand.u32 %s69, 1
          %s374 = smul.addr %s373, 64
          %s375 = scalar_lea.vmem [#allocation3], %s374
          %s376 = smul.addr %s29, 8
          %s377 = scalar_lea.vmem %s1, %s376
          // Predicated region
          $region53: #{tpu_custom_call.1} parent=51 // pred_check
            _
          $region54: #{tpu_custom_call.1} parent=51 // pred_check_branch
            %379 = sbr.rel (0) target = $region56
          $region55: #{tpu_custom_call.1} parent=51 // pred_region
            // Predicated region
            $region57: #{tpu_custom_call.1} parent=55 // pred_check
              _
            $region58: #{tpu_custom_call.1} parent=55 // pred_check_branch
              %381 = sbr.rel (0) target = $region60
            $region59: #{tpu_custom_call.1} parent=55 // pred_region
              // Predicated region
              $region72: #{tpu_custom_call.1} parent=59 // pred_check
                _
              $region73: #{tpu_custom_call.1} parent=59 // pred_check_branch
                %411 = sbr.rel (0) target = $region75
              $region74: #{tpu_custom_call.1} parent=59 // pred_region
                loop: start=0, step=1, limit=1
                $region76: #{tpu_custom_call.1} parent=74 // loop_pre_header
                  _
                $region77: #{tpu_custom_call.1} parent=74 // loop_header
                  %s413 = sphi 0, %s417
                  %p414 = scmp.ge.s32.totalorder %s413, 1
                  %s418 = sphi %s377, %s377
                  %s419 = sphi %s375, %s375
                $region78: #{tpu_custom_call.1} parent=74 // loop_header_branch
                  %416 = sbr.rel (%p414) target = $region82
                $region79: #{tpu_custom_call.1} parent=74 // loop_body
                  %v420 = vld [vmem:[%s418] sm:$0xff]
                  %421 = vst [vmem:[%s419] sm:$0xff] %v420
                  %v422 = vld [vmem:[%s418 + $0x10] sm:$0xff]
                  %423 = vst [vmem:[%s419 + $0x8] sm:$0xff] %v422
                  %v424 = vld [vmem:[%s418 + $0x20] sm:$0xff]
                  %425 = vst [vmem:[%s419 + $0x10] sm:$0xff] %v424
                  %v426 = vld [vmem:[%s418 + $0x30] sm:$0xff]
                  %427 = vst [vmem:[%s419 + $0x18] sm:$0xff] %v426
                  %v428 = vld [vmem:[%s418 + $0x40] sm:$0xff]
                  %429 = vst [vmem:[%s419 + $0x20] sm:$0xff] %v428
                  %v430 = vld [vmem:[%s418 + $0x50] sm:$0xff]
                  %431 = vst [vmem:[%s419 + $0x28] sm:$0xff] %v430
                  %v432 = vld [vmem:[%s418 + $0x60] sm:$0xff]
                  %433 = vst [vmem:[%s419 + $0x30] sm:$0xff] %v432
                  %v434 = vld [vmem:[%s418 + $0x70] sm:$0xff]
                  %435 = vst [vmem:[%s419 + $0x38] sm:$0xff] %v434
                $region80: #{tpu_custom_call.1} parent=74 // loop_footer
                  %s417 = sadd.s32 1, %s413
                $region81: #{tpu_custom_call.1} parent=74 // loop_footer_branch
                  %412 = sbr.rel target = $region77
                $region82: #{tpu_custom_call.1} parent=74 // loop_exit
                  _
              $region75: #{tpu_custom_call.1} parent=59 // pred_fallthru
                _
              // Predicated region
              $region83: #{tpu_custom_call.1} parent=59 // pred_check
                _
              $region84: #{tpu_custom_call.1} parent=59 // pred_check_branch
                %437 = sbr.rel target = $region86
              $region85: #{tpu_custom_call.1} parent=59 // pred_region
                _
              $region86: #{tpu_custom_call.1} parent=59 // pred_fallthru
                _
            $region60: #{tpu_custom_call.1} parent=55 // pred_fallthru
              _
            // Predicated region
            $region61: #{tpu_custom_call.1} parent=55 // pred_check
              _
            $region62: #{tpu_custom_call.1} parent=55 // pred_check_branch
              %383 = sbr.rel target = $region64
            $region63: #{tpu_custom_call.1} parent=55 // pred_region
              %s385 = ssub.s32 256, 1
              loop: start=0, step=1, limit=1
              $region65: #{tpu_custom_call.1} parent=63 // loop_pre_header
                _
              $region66: #{tpu_custom_call.1} parent=63 // loop_header
                %s387 = sphi 0, %s391
                %p388 = scmp.ge.s32.totalorder %s387, 1
                %s392 = sphi %s377, %s377
                %s393 = sphi %s375, %s375
              $region67: #{tpu_custom_call.1} parent=63 // loop_header_branch
                %390 = sbr.rel (%p388) target = $region71
              $region68: #{tpu_custom_call.1} parent=63 // loop_body
                %v394 = vld [vmem:[%s392] sm:%s385]
                %395 = vst [vmem:[%s393] sm:%s385] %v394
                %v396 = vld [vmem:[%s392 + $0x10] sm:%s385]
                %397 = vst [vmem:[%s393 + $0x8] sm:%s385] %v396
                %v398 = vld [vmem:[%s392 + $0x20] sm:%s385]
                %399 = vst [vmem:[%s393 + $0x10] sm:%s385] %v398
                %v400 = vld [vmem:[%s392 + $0x30] sm:%s385]
                %401 = vst [vmem:[%s393 + $0x18] sm:%s385] %v400
                %v402 = vld [vmem:[%s392 + $0x40] sm:%s385]
                %403 = vst [vmem:[%s393 + $0x20] sm:%s385] %v402
                %v404 = vld [vmem:[%s392 + $0x50] sm:%s385]
                %405 = vst [vmem:[%s393 + $0x28] sm:%s385] %v404
                %v406 = vld [vmem:[%s392 + $0x60] sm:%s385]
                %407 = vst [vmem:[%s393 + $0x30] sm:%s385] %v406
                %v408 = vld [vmem:[%s392 + $0x70] sm:%s385]
                %409 = vst [vmem:[%s393 + $0x38] sm:%s385] %v408
              $region69: #{tpu_custom_call.1} parent=63 // loop_footer
                %s391 = sadd.s32 1, %s387
              $region70: #{tpu_custom_call.1} parent=63 // loop_footer_branch
                %386 = sbr.rel target = $region66
              $region71: #{tpu_custom_call.1} parent=63 // loop_exit
                _
            $region64: #{tpu_custom_call.1} parent=55 // pred_fallthru
              _
          $region56: #{tpu_custom_call.1} parent=51 // pred_fallthru
            _
          %438 = vnop
        $region52: #{tpu_custom_call.1} parent=43 // pred_fallthru
          _
        // Predicated region
        $region87: #{tpu_custom_call.1} parent=43 // pred_check
          %p439 = pneg %p105
        $region88: #{tpu_custom_call.1} parent=43 // pred_check_branch
          %441 = sbr.rel (%p439) target = $region90
        $region89: #{tpu_custom_call.1} parent=43 // pred_region
          %p442 = scmp.lt.s32.totalorder %s29, 1
          %s443 = scalar_select %p442, %s29, 1
          %s444 = scalar_lea.vmem %s2, %s443
        $region90: #{tpu_custom_call.1} parent=43 // pred_fallthru
          _
        // Predicated region
        $region91: #{tpu_custom_call.1} parent=43 // pred_check
          %p445 = pneg %p257
        $region92: #{tpu_custom_call.1} parent=43 // pred_check_branch
          %447 = sbr.rel (%p445) target = $region94
        $region93: #{tpu_custom_call.1} parent=43 // pred_region
          %s448 = smul.u32 16, %s29
          %p449 = scmp.lt.s32.totalorder %s448, 31
          %s450 = scalar_select %p449, %s448, 31
          %s451 = smul.addr %s450, 8
          %s452 = scalar_lea.vmem %s9, %s451
          %s453 = smul.u32 16, %s29
        $region94: #{tpu_custom_call.1} parent=43 // pred_fallthru
          _
      $region44: #{tpu_custom_call.1} parent=5 // pred_fallthru
        _
      %p454 = scmp.le.s32.totalorder 1, %s21
      %p455 = scmp.lt.s32.totalorder %s21, 5
      %p456 = pnand %p454, %p455
      %p457 = pneg %p456
      // Predicated region
      $region95: #{tpu_custom_call.1} parent=5 // pred_check
        _
      $region96: #{tpu_custom_call.1} parent=5 // pred_check_branch
        %459 = sbr.rel (%p456) target = $region98
      $region97: #{tpu_custom_call.1} parent=5 // pred_region
        %s460 = ssub.s32 %s21, 1
        %s461 = sand.u32 %s72, 1
        %s462 = sand.u32 %s72, 1
        %s463 = smul.addr %s462, 64
        %s464 = scalar_lea.vmem [#allocation3], %s463
        // Predicated region
        $region99: #{tpu_custom_call.1} parent=97 // pred_check
          %p465 = pneg %p85
        $region100: #{tpu_custom_call.1} parent=97 // pred_check_branch
          %467 = sbr.rel (%p465) target = $region102
        $region101: #{tpu_custom_call.1} parent=97 // pred_region
          _
        $region102: #{tpu_custom_call.1} parent=97 // pred_fallthru
          _
        // Predicated region
        $region103: #{tpu_custom_call.1} parent=97 // pred_check
          %p468 = pneg %p216
        $region104: #{tpu_custom_call.1} parent=97 // pred_check_branch
          %470 = sbr.rel (%p468) target = $region106
        $region105: #{tpu_custom_call.1} parent=97 // pred_region
          %472 = dma.done [#allocation5], 16384
        $region106: #{tpu_custom_call.1} parent=97 // pred_fallthru
          _
        %p473 = scmp.lt.s32.totalorder %s30, 1
        %s474 = scalar_select %p473, %s30, 1
        %s475 = smul.addr %s474, 2
        %s476 = smul.addr %s475, 8
        %s477 = scalar_lea.vmem %s0, %s476
        %p478 = pneg %p59
        %p479 = pneg %p56
        %s480 = sand.u32 %s72, 1
        %s481 = sand.u32 %s72, 1
        %s482 = smul.addr %s481, 64
        %s483 = scalar_lea.vmem [#allocation3], %s482
        %p484 = pneg %p85
        %p485 = pneg %p82
        %p486 = scmp.lt.s32.totalorder %s31, 1
        %s487 = scalar_select %p486, %s31, 1
        %s488 = scalar_lea.vmem %s2, %s487
        %p489 = pneg %p111
        %p490 = pneg %p108
        %p491 = pneg %p132
        %p492 = pneg %p129
        %p493 = pneg %p153
        %p494 = pneg %p150
        %p495 = pneg %p174
        %p496 = pneg %p171
        %p497 = pneg %p195
        %p498 = pneg %p192
        %p499 = pneg %p216
        %p500 = pneg %p213
        %p501 = pneg %p237
        %p502 = pneg %p234
        %s503 = smul.u32 16, %s31
        %p504 = scmp.lt.s32.totalorder %s503, 31
        %s505 = scalar_select %p504, %s503, 31
        %s506 = smul.addr %s505, 8
        %s507 = scalar_lea.vmem %s9, %s506
        %p508 = pneg %p263
        %p509 = pneg %p260
        %p510 = pneg %p284
        %p511 = pneg %p281
        %p512 = pneg %p310
        %p513 = pneg %p307
        %s514 = sand.u32 %s297, 1
        %s515 = scalar_lea.sflag [#allocation6], %s514
        %s516 = sand.u32 %s297, 1
        %s517 = smul.addr %s516, 16
        %s518 = scalar_lea.vmem [#allocation7], %s517
        %p519 = scmp.lt.s32.totalorder %s30, 1
        %s520 = scalar_select %p519, %s30, 1
        %s521 = smul.addr %s520, 2
        %s522 = smul.addr %s521, 8
        %s523 = scalar_lea.vmem %s0, %s522
        %p524 = scmp.lt.s32.totalorder %s31, 1
        %s525 = scalar_select %p524, %s31, 1
        %s526 = scalar_lea.vmem %s2, %s525
        %s527 = smul.u32 16, %s31
        %p528 = scmp.lt.s32.totalorder %s527, 31
        %s529 = scalar_select %p528, %s527, 31
        %s530 = smul.addr %s529, 8
        %s531 = scalar_lea.vmem %s9, %s530
        %s532 = smul.u32 16, %s31
        %p533 = scmp.eq.s32.totalorder %s31, 0
        // Predicated region
        $region107: #{tpu_custom_call.1} parent=97 // pred_check
          %p534 = pneg %p533
        $region108: #{tpu_custom_call.1} parent=97 // pred_check_branch
          %536 = sbr.rel (%p534) target = $region110
        $region109: #{tpu_custom_call.1} parent=97 // pred_region
          %vm537 = vcmask 523264
          %538 = vst.msk [vmem:[#allocation2] sm:$0xff] %vm537, 0.0
          %539 = vst.msk [vmem:[#allocation2 + $0x8] sm:$0xff] %vm537, 0.0
        $region110: #{tpu_custom_call.1} parent=97 // pred_fallthru
          _
        %v540 = vld [vmem:[%s523] sm:$0xff]
        %v541 = vld [vmem:[%s523 + $0x8] sm:$0xff]
        %v542 = vld [vmem:[%s464] sm:$0xff]
        %v543 = vld [vmem:[%s464 + $0x8] sm:$0xff]
        %v544 = vld [vmem:[%s464 + $0x10] sm:$0xff]
        %v545 = vld [vmem:[%s464 + $0x18] sm:$0xff]
        %v546 = vld [vmem:[%s464 + $0x20] sm:$0xff]
        %v547 = vld [vmem:[%s464 + $0x28] sm:$0xff]
        %v548 = vld [vmem:[%s464 + $0x30] sm:$0xff]
        %v549 = vld [vmem:[%s464 + $0x38] sm:$0xff]
        %v550 = vld [vmem:[%s526] sm:$0x1]
        %v552 = vperm.slane %v550, 0
        %vm554 = vcmask 523264
        %v556 = vsel %vm554, %v540, 0
        %v559 = vsel %vm554, %v541, 0
        %561 = vmatpush.msra.mxu0 0.0
        %562 = vmatpush.msra.mxu0 0.0
        %563 = vmatpush.msra.mxu0 0.0
        %564 = vmatpush.msra.mxu0 0.0
        %565 = vmatpush.msra.mxu0 0.0
        %566 = vmatpush.msra.mxu0 0.0
        %567 = vmatpush.msra.mxu0 0.0
        %568 = vmatpush.msra.mxu0 0.0
        %569 = vmatpush.msra.mxu0 %v549
        %570 = vmatpush.msra.mxu0 %v548
        %571 = vmatpush.msra.mxu0 %v547
        %572 = vmatpush.msra.mxu0 %v546
        %573 = vmatpush.msra.mxu0 %v545
        %574 = vmatpush.msra.mxu0 %v544
        %575 = vmatpush.msra.mxu0 %v543
        %576 = vmatpush.msra.mxu0 %v542
        %577 = vmatmul.f32.gmra.mxu0 %v556
        %v578 = vpop.f32.mrf.mxu0
        %v579 = vadd.f32 %v552, %v578
        %580 = vmatmul.f32.gmra.mxu0 %v559
        %v581 = vpop.f32.mrf.mxu0
        %v582 = vadd.f32 %v552, %v581
        %583 = vdwg.mxu0
        %v584 = vld [vmem:[%s3] sm:$0xff]
        %v585 = vld [vmem:[%s3 + $0x8] sm:$0xff]
        %v586 = vld [vmem:[%s3 + $0x10] sm:$0xff]
        %v587 = vld [vmem:[%s3 + $0x18] sm:$0xff]
        %v588 = vld [vmem:[%s3 + $0x20] sm:$0xff]
        %v589 = vld [vmem:[%s3 + $0x28] sm:$0xff]
        %v590 = vld [vmem:[%s3 + $0x30] sm:$0xff]
        %v591 = vld [vmem:[%s3 + $0x38] sm:$0xff]
        %v592 = vld [vmem:[%s3 + $0x40] sm:$0xff]
        %v593 = vld [vmem:[%s3 + $0x48] sm:$0xff]
        %v594 = vld [vmem:[%s3 + $0x50] sm:$0xff]
        %v595 = vld [vmem:[%s3 + $0x58] sm:$0xff]
        %v596 = vld [vmem:[%s3 + $0x60] sm:$0xff]
        %v597 = vld [vmem:[%s3 + $0x68] sm:$0xff]
        %v598 = vld [vmem:[%s3 + $0x70] sm:$0xff]
        %v599 = vld [vmem:[%s3 + $0x78] sm:$0xff]
        %v600 = vld [vmem:[%s3 + $0x80] sm:$0xff]
        %v601 = vld [vmem:[%s3 + $0x88] sm:$0xff]
        %v602 = vld [vmem:[%s3 + $0x90] sm:$0xff]
        %v603 = vld [vmem:[%s3 + $0x98] sm:$0xff]
        %v604 = vld [vmem:[%s3 + $0xa0] sm:$0xff]
        %v605 = vld [vmem:[%s3 + $0xa8] sm:$0xff]
        %v606 = vld [vmem:[%s3 + $0xb0] sm:$0xff]
        %v607 = vld [vmem:[%s3 + $0xb8] sm:$0xff]
        %v608 = vld [vmem:[%s3 + $0xc0] sm:$0xff]
        %v609 = vld [vmem:[%s3 + $0xc8] sm:$0xff]
        %v610 = vld [vmem:[%s3 + $0xd0] sm:$0xff]
        %v611 = vld [vmem:[%s3 + $0xd8] sm:$0xff]
        %v612 = vld [vmem:[%s3 + $0xe0] sm:$0xff]
        %v613 = vld [vmem:[%s3 + $0xe8] sm:$0xff]
        %v614 = vld [vmem:[%s3 + $0xf0] sm:$0xff]
        %v615 = vld [vmem:[%s3 + $0xf8] sm:$0xff]
        %v616 = vld [vmem:[%s3 + $0x100] sm:$0xff]
        %v617 = vld [vmem:[%s3 + $0x108] sm:$0xff]
        %v618 = vld [vmem:[%s3 + $0x110] sm:$0xff]
        %v619 = vld [vmem:[%s3 + $0x118] sm:$0xff]
        %v620 = vld [vmem:[%s3 + $0x120] sm:$0xff]
        %v621 = vld [vmem:[%s3 + $0x128] sm:$0xff]
        %v622 = vld [vmem:[%s3 + $0x130] sm:$0xff]
        %v623 = vld [vmem:[%s3 + $0x138] sm:$0xff]
        %v624 = vld [vmem:[%s3 + $0x140] sm:$0xff]
        %v625 = vld [vmem:[%s3 + $0x148] sm:$0xff]
        %v626 = vld [vmem:[%s3 + $0x150] sm:$0xff]
        %v627 = vld [vmem:[%s3 + $0x158] sm:$0xff]
        %v628 = vld [vmem:[%s3 + $0x160] sm:$0xff]
        %v629 = vld [vmem:[%s3 + $0x168] sm:$0xff]
        %v630 = vld [vmem:[%s3 + $0x170] sm:$0xff]
        %v631 = vld [vmem:[%s3 + $0x178] sm:$0xff]
        %v632 = vld [vmem:[%s3 + $0x180] sm:$0xff]
        %v633 = vld [vmem:[%s3 + $0x188] sm:$0xff]
        %v634 = vld [vmem:[%s3 + $0x190] sm:$0xff]
        %v635 = vld [vmem:[%s3 + $0x198] sm:$0xff]
        %v636 = vld [vmem:[%s3 + $0x1a0] sm:$0xff]
        %v637 = vld [vmem:[%s3 + $0x1a8] sm:$0xff]
        %v638 = vld [vmem:[%s3 + $0x1b0] sm:$0xff]
        %v639 = vld [vmem:[%s3 + $0x1b8] sm:$0xff]
        %v640 = vld [vmem:[%s3 + $0x1c0] sm:$0xff]
        %v641 = vld [vmem:[%s3 + $0x1c8] sm:$0xff]
        %v642 = vld [vmem:[%s3 + $0x1d0] sm:$0xff]
        %v643 = vld [vmem:[%s3 + $0x1d8] sm:$0xff]
        %v644 = vld [vmem:[%s3 + $0x1e0] sm:$0xff]
        %v645 = vld [vmem:[%s3 + $0x1e8] sm:$0xff]
        %v646 = vld [vmem:[%s3 + $0x1f0] sm:$0xff]
        %v647 = vld [vmem:[%s3 + $0x1f8] sm:$0xff]
        %v648 = vld [vmem:[%s3 + $0x200] sm:$0xff]
        %v649 = vld [vmem:[%s3 + $0x208] sm:$0xff]
        %v650 = vld [vmem:[%s3 + $0x210] sm:$0xff]
        %v651 = vld [vmem:[%s3 + $0x218] sm:$0xff]
        %v652 = vld [vmem:[%s3 + $0x220] sm:$0xff]
        %v653 = vld [vmem:[%s3 + $0x228] sm:$0xff]
        %v654 = vld [vmem:[%s3 + $0x230] sm:$0xff]
        %v655 = vld [vmem:[%s3 + $0x238] sm:$0xff]
        %v656 = vld [vmem:[%s3 + $0x240] sm:$0xff]
        %v657 = vld [vmem:[%s3 + $0x248] sm:$0xff]
        %v658 = vld [vmem:[%s3 + $0x250] sm:$0xff]
        %v659 = vld [vmem:[%s3 + $0x258] sm:$0xff]
        %v660 = vld [vmem:[%s3 + $0x260] sm:$0xff]
        %v661 = vld [vmem:[%s3 + $0x268] sm:$0xff]
        %v662 = vld [vmem:[%s3 + $0x270] sm:$0xff]
        %v663 = vld [vmem:[%s3 + $0x278] sm:$0xff]
        %v664 = vld [vmem:[%s3 + $0x280] sm:$0xff]
        %v665 = vld [vmem:[%s3 + $0x288] sm:$0xff]
        %v666 = vld [vmem:[%s3 + $0x290] sm:$0xff]
        %v667 = vld [vmem:[%s3 + $0x298] sm:$0xff]
        %v668 = vld [vmem:[%s3 + $0x2a0] sm:$0xff]
        %v669 = vld [vmem:[%s3 + $0x2a8] sm:$0xff]
        %v670 = vld [vmem:[%s3 + $0x2b0] sm:$0xff]
        %v671 = vld [vmem:[%s3 + $0x2b8] sm:$0xff]
        %v672 = vld [vmem:[%s3 + $0x2c0] sm:$0xff]
        %v673 = vld [vmem:[%s3 + $0x2c8] sm:$0xff]
        %v674 = vld [vmem:[%s3 + $0x2d0] sm:$0xff]
        %v675 = vld [vmem:[%s3 + $0x2d8] sm:$0xff]
        %v676 = vld [vmem:[%s3 + $0x2e0] sm:$0xff]
        %v677 = vld [vmem:[%s3 + $0x2e8] sm:$0xff]
        %v678 = vld [vmem:[%s3 + $0x2f0] sm:$0xff]
        %v679 = vld [vmem:[%s3 + $0x2f8] sm:$0xff]
        %v680 = vld [vmem:[%s3 + $0x300] sm:$0xff]
        %v681 = vld [vmem:[%s3 + $0x308] sm:$0xff]
        %v682 = vld [vmem:[%s3 + $0x310] sm:$0xff]
        %v683 = vld [vmem:[%s3 + $0x318] sm:$0xff]
        %v684 = vld [vmem:[%s3 + $0x320] sm:$0xff]
        %v685 = vld [vmem:[%s3 + $0x328] sm:$0xff]
        %v686 = vld [vmem:[%s3 + $0x330] sm:$0xff]
        %v687 = vld [vmem:[%s3 + $0x338] sm:$0xff]
        %v688 = vld [vmem:[%s3 + $0x340] sm:$0xff]
        %v689 = vld [vmem:[%s3 + $0x348] sm:$0xff]
        %v690 = vld [vmem:[%s3 + $0x350] sm:$0xff]
        %v691 = vld [vmem:[%s3 + $0x358] sm:$0xff]
        %v692 = vld [vmem:[%s3 + $0x360] sm:$0xff]
        %v693 = vld [vmem:[%s3 + $0x368] sm:$0xff]
        %v694 = vld [vmem:[%s3 + $0x370] sm:$0xff]
        %v695 = vld [vmem:[%s3 + $0x378] sm:$0xff]
        %v696 = vld [vmem:[%s3 + $0x380] sm:$0xff]
        %v697 = vld [vmem:[%s3 + $0x388] sm:$0xff]
        %v698 = vld [vmem:[%s3 + $0x390] sm:$0xff]
        %v699 = vld [vmem:[%s3 + $0x398] sm:$0xff]
        %v700 = vld [vmem:[%s3 + $0x3a0] sm:$0xff]
        %v701 = vld [vmem:[%s3 + $0x3a8] sm:$0xff]
        %v702 = vld [vmem:[%s3 + $0x3b0] sm:$0xff]
        %v703 = vld [vmem:[%s3 + $0x3b8] sm:$0xff]
        %v704 = vld [vmem:[%s3 + $0x3c0] sm:$0xff]
        %v705 = vld [vmem:[%s3 + $0x3c8] sm:$0xff]
        %v706 = vld [vmem:[%s3 + $0x3d0] sm:$0xff]
        %v707 = vld [vmem:[%s3 + $0x3d8] sm:$0xff]
        %v708 = vld [vmem:[%s3 + $0x3e0] sm:$0xff]
        %v709 = vld [vmem:[%s3 + $0x3e8] sm:$0xff]
        %v710 = vld [vmem:[%s3 + $0x3f0] sm:$0xff]
        %v711 = vld [vmem:[%s3 + $0x3f8] sm:$0xff]
        %v712 = vld [vmem:[%s4] sm:$0xff]
        %v714 = vperm.slane %v712, 0
        %v715 = vperm.slane %v712, 1
        %v716 = vperm.slane %v712, 2
        %v717 = vperm.slane %v712, 3
        %v718 = vperm.slane %v712, 4
        %v719 = vperm.slane %v712, 5
        %v720 = vperm.slane %v712, 6
        %v721 = vperm.slane %v712, 7
        %730 = vmatpush.msra.mxu0 %v704
        %731 = vmatpush.msra.mxu0 %v696
        %732 = vmatpush.msra.mxu0 %v688
        %733 = vmatpush.msra.mxu0 %v680
        %734 = vmatpush.msra.mxu0 %v672
        %735 = vmatpush.msra.mxu0 %v664
        %736 = vmatpush.msra.mxu0 %v656
        %737 = vmatpush.msra.mxu0 %v648
        %738 = vmatpush.msra.mxu0 %v640
        %739 = vmatpush.msra.mxu0 %v632
        %740 = vmatpush.msra.mxu0 %v624
        %741 = vmatpush.msra.mxu0 %v616
        %742 = vmatpush.msra.mxu0 %v608
        %743 = vmatpush.msra.mxu0 %v600
        %744 = vmatpush.msra.mxu0 %v592
        %745 = vmatpush.msra.mxu0 %v584
        %746 = vmatmul.f32.gmra.mxu0 %v579
        %v747 = vpop.f32.mrf.mxu0
        %v748 = vadd.f32 %v714, %v747
        %749 = vmatmul.f32.gmra.mxu0 %v582
        %v750 = vpop.f32.mrf.mxu0
        %v751 = vadd.f32 %v714, %v750
        %752 = vdwg.mxu0
        %753 = vmatpush.msra.mxu0 %v705
        %754 = vmatpush.msra.mxu0 %v697
        %755 = vmatpush.msra.mxu0 %v689
        %756 = vmatpush.msra.mxu0 %v681
        %757 = vmatpush.msra.mxu0 %v673
        %758 = vmatpush.msra.mxu0 %v665
        %759 = vmatpush.msra.mxu0 %v657
        %760 = vmatpush.msra.mxu0 %v649
        %761 = vmatpush.msra.mxu0 %v641
        %762 = vmatpush.msra.mxu0 %v633
        %763 = vmatpush.msra.mxu0 %v625
        %764 = vmatpush.msra.mxu0 %v617
        %765 = vmatpush.msra.mxu0 %v609
        %766 = vmatpush.msra.mxu0 %v601
        %767 = vmatpush.msra.mxu0 %v593
        %768 = vmatpush.msra.mxu0 %v585
        %769 = vmatmul.f32.gmra.mxu0 %v579
        %v770 = vpop.f32.mrf.mxu0
        %v771 = vadd.f32 %v715, %v770
        %772 = vmatmul.f32.gmra.mxu0 %v582
        %v773 = vpop.f32.mrf.mxu0
        %v774 = vadd.f32 %v715, %v773
        %775 = vdwg.mxu0
        %776 = vmatpush.msra.mxu0 %v706
        %777 = vmatpush.msra.mxu0 %v698
        %778 = vmatpush.msra.mxu0 %v690
        %779 = vmatpush.msra.mxu0 %v682
        %780 = vmatpush.msra.mxu0 %v674
        %781 = vmatpush.msra.mxu0 %v666
        %782 = vmatpush.msra.mxu0 %v658
        %783 = vmatpush.msra.mxu0 %v650
        %784 = vmatpush.msra.mxu0 %v642
        %785 = vmatpush.msra.mxu0 %v634
        %786 = vmatpush.msra.mxu0 %v626
        %787 = vmatpush.msra.mxu0 %v618
        %788 = vmatpush.msra.mxu0 %v610
        %789 = vmatpush.msra.mxu0 %v602
        %790 = vmatpush.msra.mxu0 %v594
        %791 = vmatpush.msra.mxu0 %v586
        %792 = vmatmul.f32.gmra.mxu0 %v579
        %v793 = vpop.f32.mrf.mxu0
        %v794 = vadd.f32 %v716, %v793
        %795 = vmatmul.f32.gmra.mxu0 %v582
        %v796 = vpop.f32.mrf.mxu0
        %v797 = vadd.f32 %v716, %v796
        %798 = vdwg.mxu0
        %799 = vmatpush.msra.mxu0 %v707
        %800 = vmatpush.msra.mxu0 %v699
        %801 = vmatpush.msra.mxu0 %v691
        %802 = vmatpush.msra.mxu0 %v683
        %803 = vmatpush.msra.mxu0 %v675
        %804 = vmatpush.msra.mxu0 %v667
        %805 = vmatpush.msra.mxu0 %v659
        %806 = vmatpush.msra.mxu0 %v651
        %807 = vmatpush.msra.mxu0 %v643
        %808 = vmatpush.msra.mxu0 %v635
        %809 = vmatpush.msra.mxu0 %v627
        %810 = vmatpush.msra.mxu0 %v619
        %811 = vmatpush.msra.mxu0 %v611
        %812 = vmatpush.msra.mxu0 %v603
        %813 = vmatpush.msra.mxu0 %v595
        %814 = vmatpush.msra.mxu0 %v587
        %815 = vmatmul.f32.gmra.mxu0 %v579
        %v816 = vpop.f32.mrf.mxu0
        %v817 = vadd.f32 %v717, %v816
        %818 = vmatmul.f32.gmra.mxu0 %v582
        %v819 = vpop.f32.mrf.mxu0
        %v820 = vadd.f32 %v717, %v819
        %821 = vdwg.mxu0
        %822 = vmatpush.msra.mxu0 %v708
        %823 = vmatpush.msra.mxu0 %v700
        %824 = vmatpush.msra.mxu0 %v692
        %825 = vmatpush.msra.mxu0 %v684
        %826 = vmatpush.msra.mxu0 %v676
        %827 = vmatpush.msra.mxu0 %v668
        %828 = vmatpush.msra.mxu0 %v660
        %829 = vmatpush.msra.mxu0 %v652
        %830 = vmatpush.msra.mxu0 %v644
        %831 = vmatpush.msra.mxu0 %v636
        %832 = vmatpush.msra.mxu0 %v628
        %833 = vmatpush.msra.mxu0 %v620
        %834 = vmatpush.msra.mxu0 %v612
        %835 = vmatpush.msra.mxu0 %v604
        %836 = vmatpush.msra.mxu0 %v596
        %837 = vmatpush.msra.mxu0 %v588
        %838 = vmatmul.f32.gmra.mxu0 %v579
        %v839 = vpop.f32.mrf.mxu0
        %v840 = vadd.f32 %v718, %v839
        %841 = vmatmul.f32.gmra.mxu0 %v582
        %v842 = vpop.f32.mrf.mxu0
        %v843 = vadd.f32 %v718, %v842
        %844 = vdwg.mxu0
        %845 = vmatpush.msra.mxu0 %v709
        %846 = vmatpush.msra.mxu0 %v701
        %847 = vmatpush.msra.mxu0 %v693
        %848 = vmatpush.msra.mxu0 %v685
        %849 = vmatpush.msra.mxu0 %v677
        %850 = vmatpush.msra.mxu0 %v669
        %851 = vmatpush.msra.mxu0 %v661
        %852 = vmatpush.msra.mxu0 %v653
        %853 = vmatpush.msra.mxu0 %v645
        %854 = vmatpush.msra.mxu0 %v637
        %855 = vmatpush.msra.mxu0 %v629
        %856 = vmatpush.msra.mxu0 %v621
        %857 = vmatpush.msra.mxu0 %v613
        %858 = vmatpush.msra.mxu0 %v605
        %859 = vmatpush.msra.mxu0 %v597
        %860 = vmatpush.msra.mxu0 %v589
        %861 = vmatmul.f32.gmra.mxu0 %v579
        %v862 = vpop.f32.mrf.mxu0
        %v863 = vadd.f32 %v719, %v862
        %864 = vmatmul.f32.gmra.mxu0 %v582
        %v865 = vpop.f32.mrf.mxu0
        %v866 = vadd.f32 %v719, %v865
        %867 = vdwg.mxu0
        %868 = vmatpush.msra.mxu0 %v710
        %869 = vmatpush.msra.mxu0 %v702
        %870 = vmatpush.msra.mxu0 %v694
        %871 = vmatpush.msra.mxu0 %v686
        %872 = vmatpush.msra.mxu0 %v678
        %873 = vmatpush.msra.mxu0 %v670
        %874 = vmatpush.msra.mxu0 %v662
        %875 = vmatpush.msra.mxu0 %v654
        %876 = vmatpush.msra.mxu0 %v646
        %877 = vmatpush.msra.mxu0 %v638
        %878 = vmatpush.msra.mxu0 %v630
        %879 = vmatpush.msra.mxu0 %v622
        %880 = vmatpush.msra.mxu0 %v614
        %881 = vmatpush.msra.mxu0 %v606
        %882 = vmatpush.msra.mxu0 %v598
        %883 = vmatpush.msra.mxu0 %v590
        %884 = vmatmul.f32.gmra.mxu0 %v579
        %v885 = vpop.f32.mrf.mxu0
        %v886 = vadd.f32 %v720, %v885
        %887 = vmatmul.f32.gmra.mxu0 %v582
        %v888 = vpop.f32.mrf.mxu0
        %v889 = vadd.f32 %v720, %v888
        %890 = vdwg.mxu0
        %891 = vmatpush.msra.mxu0 %v711
        %892 = vmatpush.msra.mxu0 %v703
        %893 = vmatpush.msra.mxu0 %v695
        %894 = vmatpush.msra.mxu0 %v687
        %895 = vmatpush.msra.mxu0 %v679
        %896 = vmatpush.msra.mxu0 %v671
        %897 = vmatpush.msra.mxu0 %v663
        %898 = vmatpush.msra.mxu0 %v655
        %899 = vmatpush.msra.mxu0 %v647
        %900 = vmatpush.msra.mxu0 %v639
        %901 = vmatpush.msra.mxu0 %v631
        %902 = vmatpush.msra.mxu0 %v623
        %903 = vmatpush.msra.mxu0 %v615
        %904 = vmatpush.msra.mxu0 %v607
        %905 = vmatpush.msra.mxu0 %v599
        %906 = vmatpush.msra.mxu0 %v591
        %907 = vmatmul.f32.gmra.mxu0 %v579
        %v908 = vpop.f32.mrf.mxu0
        %v909 = vadd.f32 %v721, %v908
        %910 = vmatmul.f32.gmra.mxu0 %v582
        %v911 = vpop.f32.mrf.mxu0
        %v912 = vadd.f32 %v721, %v911
        %913 = vdwg.mxu0
        %v914 = vmax.f32 %v748, %v751
        %v915 = vrot.slane %v914, 4
        %v916 = vmax.f32 %v914, %v915
        %v917 = vrot.slane %v916, 2
        %v918 = vmax.f32 %v916, %v917
        %v919 = vrot.slane %v918, 1
        %v920 = vmax.f32 %v918, %v919
        %v921 = vmax.f32 %v771, %v774
        %v922 = vrot.slane %v921, 4
        %v923 = vmax.f32 %v921, %v922
        %v924 = vrot.slane %v923, 2
        %v925 = vmax.f32 %v923, %v924
        %v926 = vrot.slane %v925, 1
        %v927 = vmax.f32 %v925, %v926
        %v928 = vmax.f32 %v794, %v797
        %v929 = vrot.slane %v928, 4
        %v930 = vmax.f32 %v928, %v929
        %v931 = vrot.slane %v930, 2
        %v932 = vmax.f32 %v930, %v931
        %v933 = vrot.slane %v932, 1
        %v934 = vmax.f32 %v932, %v933
        %v935 = vmax.f32 %v817, %v820
        %v936 = vrot.slane %v935, 4
        %v937 = vmax.f32 %v935, %v936
        %v938 = vrot.slane %v937, 2
        %v939 = vmax.f32 %v937, %v938
        %v940 = vrot.slane %v939, 1
        %v941 = vmax.f32 %v939, %v940
        %v942 = vmax.f32 %v840, %v843
        %v943 = vrot.slane %v942, 4
        %v944 = vmax.f32 %v942, %v943
        %v945 = vrot.slane %v944, 2
        %v946 = vmax.f32 %v944, %v945
        %v947 = vrot.slane %v946, 1
        %v948 = vmax.f32 %v946, %v947
        %v949 = vmax.f32 %v863, %v866
        %v950 = vrot.slane %v949, 4
        %v951 = vmax.f32 %v949, %v950
        %v952 = vrot.slane %v951, 2
        %v953 = vmax.f32 %v951, %v952
        %v954 = vrot.slane %v953, 1
        %v955 = vmax.f32 %v953, %v954
        %v956 = vmax.f32 %v886, %v889
        %v957 = vrot.slane %v956, 4
        %v958 = vmax.f32 %v956, %v957
        %v959 = vrot.slane %v958, 2
        %v960 = vmax.f32 %v958, %v959
        %v961 = vrot.slane %v960, 1
        %v962 = vmax.f32 %v960, %v961
        %v963 = vmax.f32 %v909, %v912
        %v964 = vrot.slane %v963, 4
        %v965 = vmax.f32 %v963, %v964
        %v966 = vrot.slane %v965, 2
        %v967 = vmax.f32 %v965, %v966
        %v968 = vrot.slane %v967, 1
        %v969 = vmax.f32 %v967, %v968
        %v970 = vsub.f32 %v748, %v920
        %v971 = vsub.f32 %v771, %v927
        %v972 = vsub.f32 %v794, %v934
        %v973 = vsub.f32 %v817, %v941
        %v974 = vsub.f32 %v840, %v948
        %v975 = vsub.f32 %v863, %v955
        %v976 = vsub.f32 %v886, %v962
        %v977 = vsub.f32 %v909, %v969
        %v978 = vsub.f32 %v751, %v920
        %v979 = vsub.f32 %v774, %v927
        %v980 = vsub.f32 %v797, %v934
        %v981 = vsub.f32 %v820, %v941
        %v982 = vsub.f32 %v843, %v948
        %v983 = vsub.f32 %v866, %v955
        %v984 = vsub.f32 %v889, %v962
        %v985 = vsub.f32 %v912, %v969
        %v986 = vmul.f32 %v970, 1.442695
        %v987 = vpow.pop %v986
        %v988 = vmul.f32 %v971, 1.442695
        %v989 = vpow.pop %v988
        %v990 = vmul.f32 %v972, 1.442695
        %v991 = vpow.pop %v990
        %v992 = vmul.f32 %v973, 1.442695
        %v993 = vpow.pop %v992
        %v994 = vmul.f32 %v974, 1.442695
        %v995 = vpow.pop %v994
        %v996 = vmul.f32 %v975, 1.442695
        %v997 = vpow.pop %v996
        %v998 = vmul.f32 %v976, 1.442695
        %v999 = vpow.pop %v998
        %v1000 = vmul.f32 %v977, 1.442695
        %v1001 = vpow.pop %v1000
        %v1002 = vmul.f32 %v978, 1.442695
        %v1003 = vpow.pop %v1002
        %v1004 = vmul.f32 %v979, 1.442695
        %v1005 = vpow.pop %v1004
        %v1006 = vmul.f32 %v980, 1.442695
        %v1007 = vpow.pop %v1006
        %v1008 = vmul.f32 %v981, 1.442695
        %v1009 = vpow.pop %v1008
        %v1010 = vmul.f32 %v982, 1.442695
        %v1011 = vpow.pop %v1010
        %v1012 = vmul.f32 %v983, 1.442695
        %v1013 = vpow.pop %v1012
        %v1014 = vmul.f32 %v984, 1.442695
        %v1015 = vpow.pop %v1014
        %v1016 = vmul.f32 %v985, 1.442695
        %v1017 = vpow.pop %v1016
        %v1018 = vadd.f32 %v987, %v1003
        %v1019 = vrot.slane %v1018, 4
        %v1020 = vadd.f32 %v1018, %v1019
        %v1021 = vrot.slane %v1020, 2
        %v1022 = vadd.f32 %v1020, %v1021
        %v1023 = vrot.slane %v1022, 1
        %v1024 = vadd.f32 %v1022, %v1023
        %v1025 = vadd.f32 %v989, %v1005
        %v1026 = vrot.slane %v1025, 4
        %v1027 = vadd.f32 %v1025, %v1026
        %v1028 = vrot.slane %v1027, 2
        %v1029 = vadd.f32 %v1027, %v1028
        %v1030 = vrot.slane %v1029, 1
        %v1031 = vadd.f32 %v1029, %v1030
        %v1032 = vadd.f32 %v991, %v1007
        %v1033 = vrot.slane %v1032, 4
        %v1034 = vadd.f32 %v1032, %v1033
        %v1035 = vrot.slane %v1034, 2
        %v1036 = vadd.f32 %v1034, %v1035
        %v1037 = vrot.slane %v1036, 1
        %v1038 = vadd.f32 %v1036, %v1037
        %v1039 = vadd.f32 %v993, %v1009
        %v1040 = vrot.slane %v1039, 4
        %v1041 = vadd.f32 %v1039, %v1040
        %v1042 = vrot.slane %v1041, 2
        %v1043 = vadd.f32 %v1041, %v1042
        %v1044 = vrot.slane %v1043, 1
        %v1045 = vadd.f32 %v1043, %v1044
        %v1046 = vadd.f32 %v995, %v1011
        %v1047 = vrot.slane %v1046, 4
        %v1048 = vadd.f32 %v1046, %v1047
        %v1049 = vrot.slane %v1048, 2
        %v1050 = vadd.f32 %v1048, %v1049
        %v1051 = vrot.slane %v1050, 1
        %v1052 = vadd.f32 %v1050, %v1051
        %v1053 = vadd.f32 %v997, %v1013
        %v1054 = vrot.slane %v1053, 4
        %v1055 = vadd.f32 %v1053, %v1054
        %v1056 = vrot.slane %v1055, 2
        %v1057 = vadd.f32 %v1055, %v1056
        %v1058 = vrot.slane %v1057, 1
        %v1059 = vadd.f32 %v1057, %v1058
        %v1060 = vadd.f32 %v999, %v1015
        %v1061 = vrot.slane %v1060, 4
        %v1062 = vadd.f32 %v1060, %v1061
        %v1063 = vrot.slane %v1062, 2
        %v1064 = vadd.f32 %v1062, %v1063
        %v1065 = vrot.slane %v1064, 1
        %v1066 = vadd.f32 %v1064, %v1065
        %v1067 = vadd.f32 %v1001, %v1017
        %v1068 = vrot.slane %v1067, 4
        %v1069 = vadd.f32 %v1067, %v1068
        %v1070 = vrot.slane %v1069, 2
        %v1071 = vadd.f32 %v1069, %v1070
        %v1072 = vrot.slane %v1071, 1
        %v1073 = vadd.f32 %v1071, %v1072
        %v1074 = vrcp.pop %v1024
        %v1075 = vmul.f32 %v1024, %v1074
        %v1076 = vsub.f32 1.0, %v1075
        %v1077 = vmul.f32 %v1074, %v1076
        %v1078 = vadd.f32 %v1074, %v1077
        %vm1079 = vweird.f32 %v1024
        %vm1080 = vweird.f32 %v1074
        %vm1081 = vmor %vm1079, %vm1080
        %v1082 = vsel %vm1081, %v1074, %v1078
        %v1083 = vand.u32 2147483647, %v1024
        %vm1084 = vcmp.eq.f32.partialorder %v1083, 8.507059e+37
        %v1085 = vand.u32 %v1024, 2147483648
        %v1086 = vor.u32 1.1754944e-38, %v1085
        %v1087 = vsel %vm1084, %v1086, %v1082
        %v1088 = vrcp.pop %v1031
        %v1089 = vmul.f32 %v1031, %v1088
        %v1090 = vsub.f32 1.0, %v1089
        %v1091 = vmul.f32 %v1088, %v1090
        %v1092 = vadd.f32 %v1088, %v1091
        %vm1093 = vweird.f32 %v1031
        %vm1094 = vweird.f32 %v1088
        %vm1095 = vmor %vm1093, %vm1094
        %v1096 = vsel %vm1095, %v1088, %v1092
        %v1097 = vand.u32 2147483647, %v1031
        %vm1098 = vcmp.eq.f32.partialorder %v1097, 8.507059e+37
        %v1099 = vand.u32 %v1031, 2147483648
        %v1100 = vor.u32 1.1754944e-38, %v1099
        %v1101 = vsel %vm1098, %v1100, %v1096
        %v1102 = vrcp.pop %v1038
        %v1103 = vmul.f32 %v1038, %v1102
        %v1104 = vsub.f32 1.0, %v1103
        %v1105 = vmul.f32 %v1102, %v1104
        %v1106 = vadd.f32 %v1102, %v1105
        %vm1107 = vweird.f32 %v1038
        %vm1108 = vweird.f32 %v1102
        %vm1109 = vmor %vm1107, %vm1108
        %v1110 = vsel %vm1109, %v1102, %v1106
        %v1111 = vand.u32 2147483647, %v1038
        %vm1112 = vcmp.eq.f32.partialorder %v1111, 8.507059e+37
        %v1113 = vand.u32 %v1038, 2147483648
        %v1114 = vor.u32 1.1754944e-38, %v1113
        %v1115 = vsel %vm1112, %v1114, %v1110
        %v1116 = vrcp.pop %v1045
        %v1117 = vmul.f32 %v1045, %v1116
        %v1118 = vsub.f32 1.0, %v1117
        %v1119 = vmul.f32 %v1116, %v1118
        %v1120 = vadd.f32 %v1116, %v1119
        %vm1121 = vweird.f32 %v1045
        %vm1122 = vweird.f32 %v1116
        %vm1123 = vmor %vm1121, %vm1122
        %v1124 = vsel %vm1123, %v1116, %v1120
        %v1125 = vand.u32 2147483647, %v1045
        %vm1126 = vcmp.eq.f32.partialorder %v1125, 8.507059e+37
        %v1127 = vand.u32 %v1045, 2147483648
        %v1128 = vor.u32 1.1754944e-38, %v1127
        %v1129 = vsel %vm1126, %v1128, %v1124
        %v1130 = vrcp.pop %v1052
        %v1131 = vmul.f32 %v1052, %v1130
        %v1132 = vsub.f32 1.0, %v1131
        %v1133 = vmul.f32 %v1130, %v1132
        %v1134 = vadd.f32 %v1130, %v1133
        %vm1135 = vweird.f32 %v1052
        %vm1136 = vweird.f32 %v1130
        %vm1137 = vmor %vm1135, %vm1136
        %v1138 = vsel %vm1137, %v1130, %v1134
        %v1139 = vand.u32 2147483647, %v1052
        %vm1140 = vcmp.eq.f32.partialorder %v1139, 8.507059e+37
        %v1141 = vand.u32 %v1052, 2147483648
        %v1142 = vor.u32 1.1754944e-38, %v1141
        %v1143 = vsel %vm1140, %v1142, %v1138
        %v1144 = vrcp.pop %v1059
        %v1145 = vmul.f32 %v1059, %v1144
        %v1146 = vsub.f32 1.0, %v1145
        %v1147 = vmul.f32 %v1144, %v1146
        %v1148 = vadd.f32 %v1144, %v1147
        %vm1149 = vweird.f32 %v1059
        %vm1150 = vweird.f32 %v1144
        %vm1151 = vmor %vm1149, %vm1150
        %v1152 = vsel %vm1151, %v1144, %v1148
        %v1153 = vand.u32 2147483647, %v1059
        %vm1154 = vcmp.eq.f32.partialorder %v1153, 8.507059e+37
        %v1155 = vand.u32 %v1059, 2147483648
        %v1156 = vor.u32 1.1754944e-38, %v1155
        %v1157 = vsel %vm1154, %v1156, %v1152
        %v1158 = vrcp.pop %v1066
        %v1159 = vmul.f32 %v1066, %v1158
        %v1160 = vsub.f32 1.0, %v1159
        %v1161 = vmul.f32 %v1158, %v1160
        %v1162 = vadd.f32 %v1158, %v1161
        %vm1163 = vweird.f32 %v1066
        %vm1164 = vweird.f32 %v1158
        %vm1165 = vmor %vm1163, %vm1164
        %v1166 = vsel %vm1165, %v1158, %v1162
        %v1167 = vand.u32 2147483647, %v1066
        %vm1168 = vcmp.eq.f32.partialorder %v1167, 8.507059e+37
        %v1169 = vand.u32 %v1066, 2147483648
        %v1170 = vor.u32 1.1754944e-38, %v1169
        %v1171 = vsel %vm1168, %v1170, %v1166
        %v1172 = vrcp.pop %v1073
        %v1173 = vmul.f32 %v1073, %v1172
        %v1174 = vsub.f32 1.0, %v1173
        %v1175 = vmul.f32 %v1172, %v1174
        %v1176 = vadd.f32 %v1172, %v1175
        %vm1177 = vweird.f32 %v1073
        %vm1178 = vweird.f32 %v1172
        %vm1179 = vmor %vm1177, %vm1178
        %v1180 = vsel %vm1179, %v1172, %v1176
        %v1181 = vand.u32 2147483647, %v1073
        %vm1182 = vcmp.eq.f32.partialorder %v1181, 8.507059e+37
        %v1183 = vand.u32 %v1073, 2147483648
        %v1184 = vor.u32 1.1754944e-38, %v1183
        %v1185 = vsel %vm1182, %v1184, %v1180
        %v1186 = vmul.f32 %v987, %v1087
        %v1187 = vmul.f32 %v989, %v1101
        %v1188 = vmul.f32 %v991, %v1115
        %v1189 = vmul.f32 %v993, %v1129
        %v1190 = vmul.f32 %v995, %v1143
        %v1191 = vmul.f32 %v997, %v1157
        %v1192 = vmul.f32 %v999, %v1171
        %v1193 = vmul.f32 %v1001, %v1185
        %v1194 = vmul.f32 %v1003, %v1087
        %v1195 = vmul.f32 %v1005, %v1101
        %v1196 = vmul.f32 %v1007, %v1115
        %v1197 = vmul.f32 %v1009, %v1129
        %v1198 = vmul.f32 %v1011, %v1143
        %v1199 = vmul.f32 %v1013, %v1157
        %v1200 = vmul.f32 %v1015, %v1171
        %v1201 = vmul.f32 %v1017, %v1185
        %v1202 = vld [vmem:[%s5] sm:$0xff]
        %v1203 = vld [vmem:[%s5 + $0x8] sm:$0xff]
        %v1204 = vld [vmem:[%s5 + $0x10] sm:$0xff]
        %v1205 = vld [vmem:[%s5 + $0x18] sm:$0xff]
        %v1206 = vld [vmem:[%s5 + $0x20] sm:$0xff]
        %v1207 = vld [vmem:[%s5 + $0x28] sm:$0xff]
        %v1208 = vld [vmem:[%s5 + $0x30] sm:$0xff]
        %v1209 = vld [vmem:[%s5 + $0x38] sm:$0xff]
        %v1210 = vld [vmem:[%s5 + $0x40] sm:$0xff]
        %v1211 = vld [vmem:[%s5 + $0x48] sm:$0xff]
        %v1212 = vld [vmem:[%s5 + $0x50] sm:$0xff]
        %v1213 = vld [vmem:[%s5 + $0x58] sm:$0xff]
        %v1214 = vld [vmem:[%s5 + $0x60] sm:$0xff]
        %v1215 = vld [vmem:[%s5 + $0x68] sm:$0xff]
        %v1216 = vld [vmem:[%s5 + $0x70] sm:$0xff]
        %v1217 = vld [vmem:[%s5 + $0x78] sm:$0xff]
        %v1218 = vld [vmem:[%s5 + $0x80] sm:$0xff]
        %v1219 = vld [vmem:[%s5 + $0x88] sm:$0xff]
        %v1220 = vld [vmem:[%s5 + $0x90] sm:$0xff]
        %v1221 = vld [vmem:[%s5 + $0x98] sm:$0xff]
        %v1222 = vld [vmem:[%s5 + $0xa0] sm:$0xff]
        %v1223 = vld [vmem:[%s5 + $0xa8] sm:$0xff]
        %v1224 = vld [vmem:[%s5 + $0xb0] sm:$0xff]
        %v1225 = vld [vmem:[%s5 + $0xb8] sm:$0xff]
        %v1226 = vld [vmem:[%s5 + $0xc0] sm:$0xff]
        %v1227 = vld [vmem:[%s5 + $0xc8] sm:$0xff]
        %v1228 = vld [vmem:[%s5 + $0xd0] sm:$0xff]
        %v1229 = vld [vmem:[%s5 + $0xd8] sm:$0xff]
        %v1230 = vld [vmem:[%s5 + $0xe0] sm:$0xff]
        %v1231 = vld [vmem:[%s5 + $0xe8] sm:$0xff]
        %v1232 = vld [vmem:[%s5 + $0xf0] sm:$0xff]
        %v1233 = vld [vmem:[%s5 + $0xf8] sm:$0xff]
        %v1234 = vld [vmem:[%s5 + $0x100] sm:$0xff]
        %v1235 = vld [vmem:[%s5 + $0x108] sm:$0xff]
        %v1236 = vld [vmem:[%s5 + $0x110] sm:$0xff]
        %v1237 = vld [vmem:[%s5 + $0x118] sm:$0xff]
        %v1238 = vld [vmem:[%s5 + $0x120] sm:$0xff]
        %v1239 = vld [vmem:[%s5 + $0x128] sm:$0xff]
        %v1240 = vld [vmem:[%s5 + $0x130] sm:$0xff]
        %v1241 = vld [vmem:[%s5 + $0x138] sm:$0xff]
        %v1242 = vld [vmem:[%s5 + $0x140] sm:$0xff]
        %v1243 = vld [vmem:[%s5 + $0x148] sm:$0xff]
        %v1244 = vld [vmem:[%s5 + $0x150] sm:$0xff]
        %v1245 = vld [vmem:[%s5 + $0x158] sm:$0xff]
        %v1246 = vld [vmem:[%s5 + $0x160] sm:$0xff]
        %v1247 = vld [vmem:[%s5 + $0x168] sm:$0xff]
        %v1248 = vld [vmem:[%s5 + $0x170] sm:$0xff]
        %v1249 = vld [vmem:[%s5 + $0x178] sm:$0xff]
        %v1250 = vld [vmem:[%s5 + $0x180] sm:$0xff]
        %v1251 = vld [vmem:[%s5 + $0x188] sm:$0xff]
        %v1252 = vld [vmem:[%s5 + $0x190] sm:$0xff]
        %v1253 = vld [vmem:[%s5 + $0x198] sm:$0xff]
        %v1254 = vld [vmem:[%s5 + $0x1a0] sm:$0xff]
        %v1255 = vld [vmem:[%s5 + $0x1a8] sm:$0xff]
        %v1256 = vld [vmem:[%s5 + $0x1b0] sm:$0xff]
        %v1257 = vld [vmem:[%s5 + $0x1b8] sm:$0xff]
        %v1258 = vld [vmem:[%s5 + $0x1c0] sm:$0xff]
        %v1259 = vld [vmem:[%s5 + $0x1c8] sm:$0xff]
        %v1260 = vld [vmem:[%s5 + $0x1d0] sm:$0xff]
        %v1261 = vld [vmem:[%s5 + $0x1d8] sm:$0xff]
        %v1262 = vld [vmem:[%s5 + $0x1e0] sm:$0xff]
        %v1263 = vld [vmem:[%s5 + $0x1e8] sm:$0xff]
        %v1264 = vld [vmem:[%s5 + $0x1f0] sm:$0xff]
        %v1265 = vld [vmem:[%s5 + $0x1f8] sm:$0xff]
        %v1266 = vld [vmem:[%s5 + $0x200] sm:$0xff]
        %v1267 = vld [vmem:[%s5 + $0x208] sm:$0xff]
        %v1268 = vld [vmem:[%s5 + $0x210] sm:$0xff]
        %v1269 = vld [vmem:[%s5 + $0x218] sm:$0xff]
        %v1270 = vld [vmem:[%s5 + $0x220] sm:$0xff]
        %v1271 = vld [vmem:[%s5 + $0x228] sm:$0xff]
        %v1272 = vld [vmem:[%s5 + $0x230] sm:$0xff]
        %v1273 = vld [vmem:[%s5 + $0x238] sm:$0xff]
        %v1274 = vld [vmem:[%s5 + $0x240] sm:$0xff]
        %v1275 = vld [vmem:[%s5 + $0x248] sm:$0xff]
        %v1276 = vld [vmem:[%s5 + $0x250] sm:$0xff]
        %v1277 = vld [vmem:[%s5 + $0x258] sm:$0xff]
        %v1278 = vld [vmem:[%s5 + $0x260] sm:$0xff]
        %v1279 = vld [vmem:[%s5 + $0x268] sm:$0xff]
        %v1280 = vld [vmem:[%s5 + $0x270] sm:$0xff]
        %v1281 = vld [vmem:[%s5 + $0x278] sm:$0xff]
        %v1282 = vld [vmem:[%s5 + $0x280] sm:$0xff]
        %v1283 = vld [vmem:[%s5 + $0x288] sm:$0xff]
        %v1284 = vld [vmem:[%s5 + $0x290] sm:$0xff]
        %v1285 = vld [vmem:[%s5 + $0x298] sm:$0xff]
        %v1286 = vld [vmem:[%s5 + $0x2a0] sm:$0xff]
        %v1287 = vld [vmem:[%s5 + $0x2a8] sm:$0xff]
        %v1288 = vld [vmem:[%s5 + $0x2b0] sm:$0xff]
        %v1289 = vld [vmem:[%s5 + $0x2b8] sm:$0xff]
        %v1290 = vld [vmem:[%s5 + $0x2c0] sm:$0xff]
        %v1291 = vld [vmem:[%s5 + $0x2c8] sm:$0xff]
        %v1292 = vld [vmem:[%s5 + $0x2d0] sm:$0xff]
        %v1293 = vld [vmem:[%s5 + $0x2d8] sm:$0xff]
        %v1294 = vld [vmem:[%s5 + $0x2e0] sm:$0xff]
        %v1295 = vld [vmem:[%s5 + $0x2e8] sm:$0xff]
        %v1296 = vld [vmem:[%s5 + $0x2f0] sm:$0xff]
        %v1297 = vld [vmem:[%s5 + $0x2f8] sm:$0xff]
        %v1298 = vld [vmem:[%s5 + $0x300] sm:$0xff]
        %v1299 = vld [vmem:[%s5 + $0x308] sm:$0xff]
        %v1300 = vld [vmem:[%s5 + $0x310] sm:$0xff]
        %v1301 = vld [vmem:[%s5 + $0x318] sm:$0xff]
        %v1302 = vld [vmem:[%s5 + $0x320] sm:$0xff]
        %v1303 = vld [vmem:[%s5 + $0x328] sm:$0xff]
        %v1304 = vld [vmem:[%s5 + $0x330] sm:$0xff]
        %v1305 = vld [vmem:[%s5 + $0x338] sm:$0xff]
        %v1306 = vld [vmem:[%s5 + $0x340] sm:$0xff]
        %v1307 = vld [vmem:[%s5 + $0x348] sm:$0xff]
        %v1308 = vld [vmem:[%s5 + $0x350] sm:$0xff]
        %v1309 = vld [vmem:[%s5 + $0x358] sm:$0xff]
        %v1310 = vld [vmem:[%s5 + $0x360] sm:$0xff]
        %v1311 = vld [vmem:[%s5 + $0x368] sm:$0xff]
        %v1312 = vld [vmem:[%s5 + $0x370] sm:$0xff]
        %v1313 = vld [vmem:[%s5 + $0x378] sm:$0xff]
        %v1314 = vld [vmem:[%s5 + $0x380] sm:$0xff]
        %v1315 = vld [vmem:[%s5 + $0x388] sm:$0xff]
        %v1316 = vld [vmem:[%s5 + $0x390] sm:$0xff]
        %v1317 = vld [vmem:[%s5 + $0x398] sm:$0xff]
        %v1318 = vld [vmem:[%s5 + $0x3a0] sm:$0xff]
        %v1319 = vld [vmem:[%s5 + $0x3a8] sm:$0xff]
        %v1320 = vld [vmem:[%s5 + $0x3b0] sm:$0xff]
        %v1321 = vld [vmem:[%s5 + $0x3b8] sm:$0xff]
        %v1322 = vld [vmem:[%s5 + $0x3c0] sm:$0xff]
        %v1323 = vld [vmem:[%s5 + $0x3c8] sm:$0xff]
        %v1324 = vld [vmem:[%s5 + $0x3d0] sm:$0xff]
        %v1325 = vld [vmem:[%s5 + $0x3d8] sm:$0xff]
        %v1326 = vld [vmem:[%s5 + $0x3e0] sm:$0xff]
        %v1327 = vld [vmem:[%s5 + $0x3e8] sm:$0xff]
        %v1328 = vld [vmem:[%s5 + $0x3f0] sm:$0xff]
        %v1329 = vld [vmem:[%s5 + $0x3f8] sm:$0xff]
        %1330 = vmatpush.msra.mxu0 %v1217
        %1331 = vmatpush.msra.mxu0 %v1216
        %1332 = vmatpush.msra.mxu0 %v1215
        %1333 = vmatpush.msra.mxu0 %v1214
        %1334 = vmatpush.msra.mxu0 %v1213
        %1335 = vmatpush.msra.mxu0 %v1212
        %1336 = vmatpush.msra.mxu0 %v1211
        %1337 = vmatpush.msra.mxu0 %v1210
        %1338 = vmatpush.msra.mxu0 %v1209
        %1339 = vmatpush.msra.mxu0 %v1208
        %1340 = vmatpush.msra.mxu0 %v1207
        %1341 = vmatpush.msra.mxu0 %v1206
        %1342 = vmatpush.msra.mxu0 %v1205
        %1343 = vmatpush.msra.mxu0 %v1204
        %1344 = vmatpush.msra.mxu0 %v1203
        %1345 = vmatpush.msra.mxu0 %v1202
        %1346 = vmatmul.f32.gmra.mxu0 %v1186
        %v1347 = vpop.f32.mrf.mxu0
        %v1348 = vadd.f32 1e-09, %v1347
        %1349 = vmatmul.f32.gmra.mxu0 %v1194
        %v1350 = vpop.f32.mrf.mxu0
        %v1351 = vadd.f32 1e-09, %v1350
        %1352 = vdwg.mxu0
        %1353 = vmatpush.msra.mxu0 %v1233
        %1354 = vmatpush.msra.mxu0 %v1232
        %1355 = vmatpush.msra.mxu0 %v1231
        %1356 = vmatpush.msra.mxu0 %v1230
        %1357 = vmatpush.msra.mxu0 %v1229
        %1358 = vmatpush.msra.mxu0 %v1228
        %1359 = vmatpush.msra.mxu0 %v1227
        %1360 = vmatpush.msra.mxu0 %v1226
        %1361 = vmatpush.msra.mxu0 %v1225
        %1362 = vmatpush.msra.mxu0 %v1224
        %1363 = vmatpush.msra.mxu0 %v1223
        %1364 = vmatpush.msra.mxu0 %v1222
        %1365 = vmatpush.msra.mxu0 %v1221
        %1366 = vmatpush.msra.mxu0 %v1220
        %1367 = vmatpush.msra.mxu0 %v1219
        %1368 = vmatpush.msra.mxu0 %v1218
        %1369 = vmatmul.f32.gmra.mxu0 %v1187
        %v1370 = vpop.f32.mrf.mxu0
        %v1371 = vadd.f32 %v1348, %v1370
        %1372 = vmatmul.f32.gmra.mxu0 %v1195
        %v1373 = vpop.f32.mrf.mxu0
        %v1374 = vadd.f32 %v1351, %v1373
        %1375 = vdwg.mxu0
        %1376 = vmatpush.msra.mxu0 %v1249
        %1377 = vmatpush.msra.mxu0 %v1248
        %1378 = vmatpush.msra.mxu0 %v1247
        %1379 = vmatpush.msra.mxu0 %v1246
        %1380 = vmatpush.msra.mxu0 %v1245
        %1381 = vmatpush.msra.mxu0 %v1244
        %1382 = vmatpush.msra.mxu0 %v1243
        %1383 = vmatpush.msra.mxu0 %v1242
        %1384 = vmatpush.msra.mxu0 %v1241
        %1385 = vmatpush.msra.mxu0 %v1240
        %1386 = vmatpush.msra.mxu0 %v1239
        %1387 = vmatpush.msra.mxu0 %v1238
        %1388 = vmatpush.msra.mxu0 %v1237
        %1389 = vmatpush.msra.mxu0 %v1236
        %1390 = vmatpush.msra.mxu0 %v1235
        %1391 = vmatpush.msra.mxu0 %v1234
        %1392 = vmatmul.f32.gmra.mxu0 %v1188
        %v1393 = vpop.f32.mrf.mxu0
        %v1394 = vadd.f32 %v1371, %v1393
        %1395 = vmatmul.f32.gmra.mxu0 %v1196
        %v1396 = vpop.f32.mrf.mxu0
        %v1397 = vadd.f32 %v1374, %v1396
        %1398 = vdwg.mxu0
        %1399 = vmatpush.msra.mxu0 %v1265
        %1400 = vmatpush.msra.mxu0 %v1264
        %1401 = vmatpush.msra.mxu0 %v1263
        %1402 = vmatpush.msra.mxu0 %v1262
        %1403 = vmatpush.msra.mxu0 %v1261
        %1404 = vmatpush.msra.mxu0 %v1260
        %1405 = vmatpush.msra.mxu0 %v1259
        %1406 = vmatpush.msra.mxu0 %v1258
        %1407 = vmatpush.msra.mxu0 %v1257
        %1408 = vmatpush.msra.mxu0 %v1256
        %1409 = vmatpush.msra.mxu0 %v1255
        %1410 = vmatpush.msra.mxu0 %v1254
        %1411 = vmatpush.msra.mxu0 %v1253
        %1412 = vmatpush.msra.mxu0 %v1252
        %1413 = vmatpush.msra.mxu0 %v1251
        %1414 = vmatpush.msra.mxu0 %v1250
        %1415 = vmatmul.f32.gmra.mxu0 %v1189
        %v1416 = vpop.f32.mrf.mxu0
        %v1417 = vadd.f32 %v1394, %v1416
        %1418 = vmatmul.f32.gmra.mxu0 %v1197
        %v1419 = vpop.f32.mrf.mxu0
        %v1420 = vadd.f32 %v1397, %v1419
        %1421 = vdwg.mxu0
        %1422 = vmatpush.msra.mxu0 %v1281
        %1423 = vmatpush.msra.mxu0 %v1280
        %1424 = vmatpush.msra.mxu0 %v1279
        %1425 = vmatpush.msra.mxu0 %v1278
        %1426 = vmatpush.msra.mxu0 %v1277
        %1427 = vmatpush.msra.mxu0 %v1276
        %1428 = vmatpush.msra.mxu0 %v1275
        %1429 = vmatpush.msra.mxu0 %v1274
        %1430 = vmatpush.msra.mxu0 %v1273
        %1431 = vmatpush.msra.mxu0 %v1272
        %1432 = vmatpush.msra.mxu0 %v1271
        %1433 = vmatpush.msra.mxu0 %v1270
        %1434 = vmatpush.msra.mxu0 %v1269
        %1435 = vmatpush.msra.mxu0 %v1268
        %1436 = vmatpush.msra.mxu0 %v1267
        %1437 = vmatpush.msra.mxu0 %v1266
        %1438 = vmatmul.f32.gmra.mxu0 %v1190
        %v1439 = vpop.f32.mrf.mxu0
        %v1440 = vadd.f32 %v1417, %v1439
        %1441 = vmatmul.f32.gmra.mxu0 %v1198
        %v1442 = vpop.f32.mrf.mxu0
        %v1443 = vadd.f32 %v1420, %v1442
        %1444 = vdwg.mxu0
        %1445 = vmatpush.msra.mxu0 %v1297
        %1446 = vmatpush.msra.mxu0 %v1296
        %1447 = vmatpush.msra.mxu0 %v1295
        %1448 = vmatpush.msra.mxu0 %v1294
        %1449 = vmatpush.msra.mxu0 %v1293
        %1450 = vmatpush.msra.mxu0 %v1292
        %1451 = vmatpush.msra.mxu0 %v1291
        %1452 = vmatpush.msra.mxu0 %v1290
        %1453 = vmatpush.msra.mxu0 %v1289
        %1454 = vmatpush.msra.mxu0 %v1288
        %1455 = vmatpush.msra.mxu0 %v1287
        %1456 = vmatpush.msra.mxu0 %v1286
        %1457 = vmatpush.msra.mxu0 %v1285
        %1458 = vmatpush.msra.mxu0 %v1284
        %1459 = vmatpush.msra.mxu0 %v1283
        %1460 = vmatpush.msra.mxu0 %v1282
        %1461 = vmatmul.f32.gmra.mxu0 %v1191
        %v1462 = vpop.f32.mrf.mxu0
        %v1463 = vadd.f32 %v1440, %v1462
        %1464 = vmatmul.f32.gmra.mxu0 %v1199
        %v1465 = vpop.f32.mrf.mxu0
        %v1466 = vadd.f32 %v1443, %v1465
        %1467 = vdwg.mxu0
        %1468 = vmatpush.msra.mxu0 %v1313
        %1469 = vmatpush.msra.mxu0 %v1312
        %1470 = vmatpush.msra.mxu0 %v1311
        %1471 = vmatpush.msra.mxu0 %v1310
        %1472 = vmatpush.msra.mxu0 %v1309
        %1473 = vmatpush.msra.mxu0 %v1308
        %1474 = vmatpush.msra.mxu0 %v1307
        %1475 = vmatpush.msra.mxu0 %v1306
        %1476 = vmatpush.msra.mxu0 %v1305
        %1477 = vmatpush.msra.mxu0 %v1304
        %1478 = vmatpush.msra.mxu0 %v1303
        %1479 = vmatpush.msra.mxu0 %v1302
        %1480 = vmatpush.msra.mxu0 %v1301
        %1481 = vmatpush.msra.mxu0 %v1300
        %1482 = vmatpush.msra.mxu0 %v1299
        %1483 = vmatpush.msra.mxu0 %v1298
        %1484 = vmatmul.f32.gmra.mxu0 %v1192
        %v1485 = vpop.f32.mrf.mxu0
        %v1486 = vadd.f32 %v1463, %v1485
        %1487 = vmatmul.f32.gmra.mxu0 %v1200
        %v1488 = vpop.f32.mrf.mxu0
        %v1489 = vadd.f32 %v1466, %v1488
        %1490 = vdwg.mxu0
        %1491 = vmatpush.msra.mxu0 %v1329
        %1492 = vmatpush.msra.mxu0 %v1328
        %1493 = vmatpush.msra.mxu0 %v1327
        %1494 = vmatpush.msra.mxu0 %v1326
        %1495 = vmatpush.msra.mxu0 %v1325
        %1496 = vmatpush.msra.mxu0 %v1324
        %1497 = vmatpush.msra.mxu0 %v1323
        %1498 = vmatpush.msra.mxu0 %v1322
        %1499 = vmatpush.msra.mxu0 %v1321
        %1500 = vmatpush.msra.mxu0 %v1320
        %1501 = vmatpush.msra.mxu0 %v1319
        %1502 = vmatpush.msra.mxu0 %v1318
        %1503 = vmatpush.msra.mxu0 %v1317
        %1504 = vmatpush.msra.mxu0 %v1316
        %1505 = vmatpush.msra.mxu0 %v1315
        %1506 = vmatpush.msra.mxu0 %v1314
        %1507 = vmatmul.f32.gmra.mxu0 %v1193
        %v1508 = vpop.f32.mrf.mxu0
        %v1509 = vadd.f32 %v1486, %v1508
        %1510 = vmatmul.f32.gmra.mxu0 %v1201
        %v1511 = vpop.f32.mrf.mxu0
        %v1512 = vadd.f32 %v1489, %v1511
        %1513 = vdwg.mxu0
        %v1514 = vrcp.pop %v1509
        %v1515 = vmul.f32 %v1509, %v1514
        %v1516 = vsub.f32 1.0, %v1515
        %v1517 = vmul.f32 %v1514, %v1516
        %v1518 = vadd.f32 %v1514, %v1517
        %vm1519 = vweird.f32 %v1509
        %vm1520 = vweird.f32 %v1514
        %vm1521 = vmor %vm1519, %vm1520
        %v1522 = vsel %vm1521, %v1514, %v1518
        %v1523 = vand.u32 2147483647, %v1509
        %vm1524 = vcmp.eq.f32.partialorder %v1523, 8.507059e+37
        %v1525 = vand.u32 %v1509, 2147483648
        %v1526 = vor.u32 1.1754944e-38, %v1525
        %v1527 = vsel %vm1524, %v1526, %v1522
        %v1528 = vrcp.pop %v1512
        %v1529 = vmul.f32 %v1512, %v1528
        %v1530 = vsub.f32 1.0, %v1529
        %v1531 = vmul.f32 %v1528, %v1530
        %v1532 = vadd.f32 %v1528, %v1531
        %vm1533 = vweird.f32 %v1512
        %vm1534 = vweird.f32 %v1528
        %vm1535 = vmor %vm1533, %vm1534
        %v1536 = vsel %vm1535, %v1528, %v1532
        %v1537 = vand.u32 2147483647, %v1512
        %vm1538 = vcmp.eq.f32.partialorder %v1537, 8.507059e+37
        %v1539 = vand.u32 %v1512, 2147483648
        %v1540 = vor.u32 1.1754944e-38, %v1539
        %v1541 = vsel %vm1538, %v1540, %v1536
        %v1542 = vld [vmem:[%s6] sm:$0xff]
        %v1543 = vld [vmem:[%s6 + $0x8] sm:$0xff]
        %v1544 = vld [vmem:[%s6 + $0x10] sm:$0xff]
        %v1545 = vld [vmem:[%s6 + $0x18] sm:$0xff]
        %v1546 = vld [vmem:[%s6 + $0x20] sm:$0xff]
        %v1547 = vld [vmem:[%s6 + $0x28] sm:$0xff]
        %v1548 = vld [vmem:[%s6 + $0x30] sm:$0xff]
        %v1549 = vld [vmem:[%s6 + $0x38] sm:$0xff]
        %v1550 = vld [vmem:[%s6 + $0x40] sm:$0xff]
        %v1551 = vld [vmem:[%s6 + $0x48] sm:$0xff]
        %v1552 = vld [vmem:[%s6 + $0x50] sm:$0xff]
        %v1553 = vld [vmem:[%s6 + $0x58] sm:$0xff]
        %v1554 = vld [vmem:[%s6 + $0x60] sm:$0xff]
        %v1555 = vld [vmem:[%s6 + $0x68] sm:$0xff]
        %v1556 = vld [vmem:[%s6 + $0x70] sm:$0xff]
        %v1557 = vld [vmem:[%s6 + $0x78] sm:$0xff]
        %vm1558 = vcmask 130048
        %v1560 = vsel %vm1558, %v1527, 0
        %v1563 = vsel %vm1558, %v1541, 0
        %1565 = vmatpush.msra.mxu0 0.0
        %1566 = vmatpush.msra.mxu0 0.0
        %1567 = vmatpush.msra.mxu0 0.0
        %1568 = vmatpush.msra.mxu0 0.0
        %1569 = vmatpush.msra.mxu0 0.0
        %1570 = vmatpush.msra.mxu0 0.0
        %1571 = vmatpush.msra.mxu0 0.0
        %1572 = vmatpush.msra.mxu0 0.0
        %1573 = vmatpush.msra.mxu0 0.0
        %1574 = vmatpush.msra.mxu0 0.0
        %1575 = vmatpush.msra.mxu0 0.0
        %1576 = vmatpush.msra.mxu0 0.0
        %1577 = vmatpush.msra.mxu0 0.0
        %1578 = vmatpush.msra.mxu0 0.0
        %1579 = vmatpush.msra.mxu0 %v1550
        %1580 = vmatpush.msra.mxu0 %v1542
        %1581 = vmatmul.f32.gmra.mxu0 %v1560
        %v1582 = vpop.f32.mrf.mxu0
        %v1583 = vadd.f32 0.0, %v1582
        %1584 = vmatmul.f32.gmra.mxu0 %v1563
        %v1585 = vpop.f32.mrf.mxu0
        %v1586 = vadd.f32 0.0, %v1585
        %1587 = vdwg.mxu0
        %1588 = vmatpush.msra.mxu0 0.0
        %1589 = vmatpush.msra.mxu0 0.0
        %1590 = vmatpush.msra.mxu0 0.0
        %1591 = vmatpush.msra.mxu0 0.0
        %1592 = vmatpush.msra.mxu0 0.0
        %1593 = vmatpush.msra.mxu0 0.0
        %1594 = vmatpush.msra.mxu0 0.0
        %1595 = vmatpush.msra.mxu0 0.0
        %1596 = vmatpush.msra.mxu0 0.0
        %1597 = vmatpush.msra.mxu0 0.0
        %1598 = vmatpush.msra.mxu0 0.0
        %1599 = vmatpush.msra.mxu0 0.0
        %1600 = vmatpush.msra.mxu0 0.0
        %1601 = vmatpush.msra.mxu0 0.0
        %1602 = vmatpush.msra.mxu0 %v1551
        %1603 = vmatpush.msra.mxu0 %v1543
        %1604 = vmatmul.f32.gmra.mxu0 %v1560
        %v1605 = vpop.f32.mrf.mxu0
        %v1606 = vadd.f32 0.0, %v1605
        %1607 = vmatmul.f32.gmra.mxu0 %v1563
        %v1608 = vpop.f32.mrf.mxu0
        %v1609 = vadd.f32 0.0, %v1608
        %1610 = vdwg.mxu0
        %1611 = vmatpush.msra.mxu0 0.0
        %1612 = vmatpush.msra.mxu0 0.0
        %1613 = vmatpush.msra.mxu0 0.0
        %1614 = vmatpush.msra.mxu0 0.0
        %1615 = vmatpush.msra.mxu0 0.0
        %1616 = vmatpush.msra.mxu0 0.0
        %1617 = vmatpush.msra.mxu0 0.0
        %1618 = vmatpush.msra.mxu0 0.0
        %1619 = vmatpush.msra.mxu0 0.0
        %1620 = vmatpush.msra.mxu0 0.0
        %1621 = vmatpush.msra.mxu0 0.0
        %1622 = vmatpush.msra.mxu0 0.0
        %1623 = vmatpush.msra.mxu0 0.0
        %1624 = vmatpush.msra.mxu0 0.0
        %1625 = vmatpush.msra.mxu0 %v1552
        %1626 = vmatpush.msra.mxu0 %v1544
        %1627 = vmatmul.f32.gmra.mxu0 %v1560
        %v1628 = vpop.f32.mrf.mxu0
        %v1629 = vadd.f32 0.0, %v1628
        %1630 = vmatmul.f32.gmra.mxu0 %v1563
        %v1631 = vpop.f32.mrf.mxu0
        %v1632 = vadd.f32 0.0, %v1631
        %1633 = vdwg.mxu0
        %1634 = vmatpush.msra.mxu0 0.0
        %1635 = vmatpush.msra.mxu0 0.0
        %1636 = vmatpush.msra.mxu0 0.0
        %1637 = vmatpush.msra.mxu0 0.0
        %1638 = vmatpush.msra.mxu0 0.0
        %1639 = vmatpush.msra.mxu0 0.0
        %1640 = vmatpush.msra.mxu0 0.0
        %1641 = vmatpush.msra.mxu0 0.0
        %1642 = vmatpush.msra.mxu0 0.0
        %1643 = vmatpush.msra.mxu0 0.0
        %1644 = vmatpush.msra.mxu0 0.0
        %1645 = vmatpush.msra.mxu0 0.0
        %1646 = vmatpush.msra.mxu0 0.0
        %1647 = vmatpush.msra.mxu0 0.0
        %1648 = vmatpush.msra.mxu0 %v1553
        %1649 = vmatpush.msra.mxu0 %v1545
        %1650 = vmatmul.f32.gmra.mxu0 %v1560
        %v1651 = vpop.f32.mrf.mxu0
        %v1652 = vadd.f32 0.0, %v1651
        %1653 = vmatmul.f32.gmra.mxu0 %v1563
        %v1654 = vpop.f32.mrf.mxu0
        %v1655 = vadd.f32 0.0, %v1654
        %1656 = vdwg.mxu0
        %1657 = vmatpush.msra.mxu0 0.0
        %1658 = vmatpush.msra.mxu0 0.0
        %1659 = vmatpush.msra.mxu0 0.0
        %1660 = vmatpush.msra.mxu0 0.0
        %1661 = vmatpush.msra.mxu0 0.0
        %1662 = vmatpush.msra.mxu0 0.0
        %1663 = vmatpush.msra.mxu0 0.0
        %1664 = vmatpush.msra.mxu0 0.0
        %1665 = vmatpush.msra.mxu0 0.0
        %1666 = vmatpush.msra.mxu0 0.0
        %1667 = vmatpush.msra.mxu0 0.0
        %1668 = vmatpush.msra.mxu0 0.0
        %1669 = vmatpush.msra.mxu0 0.0
        %1670 = vmatpush.msra.mxu0 0.0
        %1671 = vmatpush.msra.mxu0 %v1554
        %1672 = vmatpush.msra.mxu0 %v1546
        %1673 = vmatmul.f32.gmra.mxu0 %v1560
        %v1674 = vpop.f32.mrf.mxu0
        %v1675 = vadd.f32 0.0, %v1674
        %1676 = vmatmul.f32.gmra.mxu0 %v1563
        %v1677 = vpop.f32.mrf.mxu0
        %v1678 = vadd.f32 0.0, %v1677
        %1679 = vdwg.mxu0
        %1680 = vmatpush.msra.mxu0 0.0
        %1681 = vmatpush.msra.mxu0 0.0
        %1682 = vmatpush.msra.mxu0 0.0
        %1683 = vmatpush.msra.mxu0 0.0
        %1684 = vmatpush.msra.mxu0 0.0
        %1685 = vmatpush.msra.mxu0 0.0
        %1686 = vmatpush.msra.mxu0 0.0
        %1687 = vmatpush.msra.mxu0 0.0
        %1688 = vmatpush.msra.mxu0 0.0
        %1689 = vmatpush.msra.mxu0 0.0
        %1690 = vmatpush.msra.mxu0 0.0
        %1691 = vmatpush.msra.mxu0 0.0
        %1692 = vmatpush.msra.mxu0 0.0
        %1693 = vmatpush.msra.mxu0 0.0
        %1694 = vmatpush.msra.mxu0 %v1555
        %1695 = vmatpush.msra.mxu0 %v1547
        %1696 = vmatmul.f32.gmra.mxu0 %v1560
        %v1697 = vpop.f32.mrf.mxu0
        %v1698 = vadd.f32 0.0, %v1697
        %1699 = vmatmul.f32.gmra.mxu0 %v1563
        %v1700 = vpop.f32.mrf.mxu0
        %v1701 = vadd.f32 0.0, %v1700
        %1702 = vdwg.mxu0
        %1703 = vmatpush.msra.mxu0 0.0
        %1704 = vmatpush.msra.mxu0 0.0
        %1705 = vmatpush.msra.mxu0 0.0
        %1706 = vmatpush.msra.mxu0 0.0
        %1707 = vmatpush.msra.mxu0 0.0
        %1708 = vmatpush.msra.mxu0 0.0
        %1709 = vmatpush.msra.mxu0 0.0
        %1710 = vmatpush.msra.mxu0 0.0
        %1711 = vmatpush.msra.mxu0 0.0
        %1712 = vmatpush.msra.mxu0 0.0
        %1713 = vmatpush.msra.mxu0 0.0
        %1714 = vmatpush.msra.mxu0 0.0
        %1715 = vmatpush.msra.mxu0 0.0
        %1716 = vmatpush.msra.mxu0 0.0
        %1717 = vmatpush.msra.mxu0 %v1556
        %1718 = vmatpush.msra.mxu0 %v1548
        %1719 = vmatmul.f32.gmra.mxu0 %v1560
        %v1720 = vpop.f32.mrf.mxu0
        %v1721 = vadd.f32 0.0, %v1720
        %1722 = vmatmul.f32.gmra.mxu0 %v1563
        %v1723 = vpop.f32.mrf.mxu0
        %v1724 = vadd.f32 0.0, %v1723
        %1725 = vdwg.mxu0
        %1726 = vmatpush.msra.mxu0 0.0
        %1727 = vmatpush.msra.mxu0 0.0
        %1728 = vmatpush.msra.mxu0 0.0
        %1729 = vmatpush.msra.mxu0 0.0
        %1730 = vmatpush.msra.mxu0 0.0
        %1731 = vmatpush.msra.mxu0 0.0
        %1732 = vmatpush.msra.mxu0 0.0
        %1733 = vmatpush.msra.mxu0 0.0
        %1734 = vmatpush.msra.mxu0 0.0
        %1735 = vmatpush.msra.mxu0 0.0
        %1736 = vmatpush.msra.mxu0 0.0
        %1737 = vmatpush.msra.mxu0 0.0
        %1738 = vmatpush.msra.mxu0 0.0
        %1739 = vmatpush.msra.mxu0 0.0
        %1740 = vmatpush.msra.mxu0 %v1557
        %1741 = vmatpush.msra.mxu0 %v1549
        %1742 = vmatmul.f32.gmra.mxu0 %v1560
        %v1743 = vpop.f32.mrf.mxu0
        %v1744 = vadd.f32 0.0, %v1743
        %1745 = vmatmul.f32.gmra.mxu0 %v1563
        %v1746 = vpop.f32.mrf.mxu0
        %v1747 = vadd.f32 0.0, %v1746
        %1748 = vdwg.mxu0
        %v1749 = vmul.f32 %v1186, %v1583
        %v1750 = vmul.f32 %v1187, %v1606
        %v1751 = vmul.f32 %v1188, %v1629
        %v1752 = vmul.f32 %v1189, %v1652
        %v1753 = vmul.f32 %v1190, %v1675
        %v1754 = vmul.f32 %v1191, %v1698
        %v1755 = vmul.f32 %v1192, %v1721
        %v1756 = vmul.f32 %v1193, %v1744
        %v1757 = vmul.f32 %v1194, %v1586
        %v1758 = vmul.f32 %v1195, %v1609
        %v1759 = vmul.f32 %v1196, %v1632
        %v1760 = vmul.f32 %v1197, %v1655
        %v1761 = vmul.f32 %v1198, %v1678
        %v1762 = vmul.f32 %v1199, %v1701
        %v1763 = vmul.f32 %v1200, %v1724
        %v1764 = vmul.f32 %v1201, %v1747
        %v1765 = vld [vmem:[#allocation4] sm:$0xff]
        %v1766 = vld [vmem:[#allocation4 + $0x8] sm:$0xff]
        %v1767 = vld [vmem:[#allocation4 + $0x10] sm:$0xff]
        %v1768 = vld [vmem:[#allocation4 + $0x18] sm:$0xff]
        %v1769 = vld [vmem:[#allocation4 + $0x20] sm:$0xff]
        %v1770 = vld [vmem:[#allocation4 + $0x28] sm:$0xff]
        %v1771 = vld [vmem:[#allocation4 + $0x30] sm:$0xff]
        %v1772 = vld [vmem:[#allocation4 + $0x38] sm:$0xff]
        %v1773 = vld [vmem:[#allocation4 + $0x40] sm:$0xff]
        %v1774 = vld [vmem:[#allocation4 + $0x48] sm:$0xff]
        %v1775 = vld [vmem:[#allocation4 + $0x50] sm:$0xff]
        %v1776 = vld [vmem:[#allocation4 + $0x58] sm:$0xff]
        %v1777 = vld [vmem:[#allocation4 + $0x60] sm:$0xff]
        %v1778 = vld [vmem:[#allocation4 + $0x68] sm:$0xff]
        %v1779 = vld [vmem:[#allocation4 + $0x70] sm:$0xff]
        %v1780 = vld [vmem:[#allocation4 + $0x78] sm:$0xff]
        %v1781 = vld [vmem:[#allocation4 + $0x80] sm:$0xff]
        %v1782 = vld [vmem:[#allocation4 + $0x88] sm:$0xff]
        %v1783 = vld [vmem:[#allocation4 + $0x90] sm:$0xff]
        %v1784 = vld [vmem:[#allocation4 + $0x98] sm:$0xff]
        %v1785 = vld [vmem:[#allocation4 + $0xa0] sm:$0xff]
        %v1786 = vld [vmem:[#allocation4 + $0xa8] sm:$0xff]
        %v1787 = vld [vmem:[#allocation4 + $0xb0] sm:$0xff]
        %v1788 = vld [vmem:[#allocation4 + $0xb8] sm:$0xff]
        %v1789 = vld [vmem:[#allocation4 + $0xc0] sm:$0xff]
        %v1790 = vld [vmem:[#allocation4 + $0xc8] sm:$0xff]
        %v1791 = vld [vmem:[#allocation4 + $0xd0] sm:$0xff]
        %v1792 = vld [vmem:[#allocation4 + $0xd8] sm:$0xff]
        %v1793 = vld [vmem:[#allocation4 + $0xe0] sm:$0xff]
        %v1794 = vld [vmem:[#allocation4 + $0xe8] sm:$0xff]
        %v1795 = vld [vmem:[#allocation4 + $0xf0] sm:$0xff]
        %v1796 = vld [vmem:[#allocation4 + $0xf8] sm:$0xff]
        %v1797 = vld [vmem:[#allocation4 + $0x100] sm:$0xff]
        %v1798 = vld [vmem:[#allocation4 + $0x108] sm:$0xff]
        %v1799 = vld [vmem:[#allocation4 + $0x110] sm:$0xff]
        %v1800 = vld [vmem:[#allocation4 + $0x118] sm:$0xff]
        %v1801 = vld [vmem:[#allocation4 + $0x120] sm:$0xff]
        %v1802 = vld [vmem:[#allocation4 + $0x128] sm:$0xff]
        %v1803 = vld [vmem:[#allocation4 + $0x130] sm:$0xff]
        %v1804 = vld [vmem:[#allocation4 + $0x138] sm:$0xff]
        %v1805 = vld [vmem:[#allocation4 + $0x140] sm:$0xff]
        %v1806 = vld [vmem:[#allocation4 + $0x148] sm:$0xff]
        %v1807 = vld [vmem:[#allocation4 + $0x150] sm:$0xff]
        %v1808 = vld [vmem:[#allocation4 + $0x158] sm:$0xff]
        %v1809 = vld [vmem:[#allocation4 + $0x160] sm:$0xff]
        %v1810 = vld [vmem:[#allocation4 + $0x168] sm:$0xff]
        %v1811 = vld [vmem:[#allocation4 + $0x170] sm:$0xff]
        %v1812 = vld [vmem:[#allocation4 + $0x178] sm:$0xff]
        %v1813 = vld [vmem:[#allocation4 + $0x180] sm:$0xff]
        %v1814 = vld [vmem:[#allocation4 + $0x188] sm:$0xff]
        %v1815 = vld [vmem:[#allocation4 + $0x190] sm:$0xff]
        %v1816 = vld [vmem:[#allocation4 + $0x198] sm:$0xff]
        %v1817 = vld [vmem:[#allocation4 + $0x1a0] sm:$0xff]
        %v1818 = vld [vmem:[#allocation4 + $0x1a8] sm:$0xff]
        %v1819 = vld [vmem:[#allocation4 + $0x1b0] sm:$0xff]
        %v1820 = vld [vmem:[#allocation4 + $0x1b8] sm:$0xff]
        %v1821 = vld [vmem:[#allocation4 + $0x1c0] sm:$0xff]
        %v1822 = vld [vmem:[#allocation4 + $0x1c8] sm:$0xff]
        %v1823 = vld [vmem:[#allocation4 + $0x1d0] sm:$0xff]
        %v1824 = vld [vmem:[#allocation4 + $0x1d8] sm:$0xff]
        %v1825 = vld [vmem:[#allocation4 + $0x1e0] sm:$0xff]
        %v1826 = vld [vmem:[#allocation4 + $0x1e8] sm:$0xff]
        %v1827 = vld [vmem:[#allocation4 + $0x1f0] sm:$0xff]
        %v1828 = vld [vmem:[#allocation4 + $0x1f8] sm:$0xff]
        %v1829 = vld [vmem:[#allocation4 + $0x200] sm:$0xff]
        %v1830 = vld [vmem:[#allocation4 + $0x208] sm:$0xff]
        %v1831 = vld [vmem:[#allocation4 + $0x210] sm:$0xff]
        %v1832 = vld [vmem:[#allocation4 + $0x218] sm:$0xff]
        %v1833 = vld [vmem:[#allocation4 + $0x220] sm:$0xff]
        %v1834 = vld [vmem:[#allocation4 + $0x228] sm:$0xff]
        %v1835 = vld [vmem:[#allocation4 + $0x230] sm:$0xff]
        %v1836 = vld [vmem:[#allocation4 + $0x238] sm:$0xff]
        %v1837 = vld [vmem:[#allocation4 + $0x240] sm:$0xff]
        %v1838 = vld [vmem:[#allocation4 + $0x248] sm:$0xff]
        %v1839 = vld [vmem:[#allocation4 + $0x250] sm:$0xff]
        %v1840 = vld [vmem:[#allocation4 + $0x258] sm:$0xff]
        %v1841 = vld [vmem:[#allocation4 + $0x260] sm:$0xff]
        %v1842 = vld [vmem:[#allocation4 + $0x268] sm:$0xff]
        %v1843 = vld [vmem:[#allocation4 + $0x270] sm:$0xff]
        %v1844 = vld [vmem:[#allocation4 + $0x278] sm:$0xff]
        %v1845 = vld [vmem:[#allocation4 + $0x280] sm:$0xff]
        %v1846 = vld [vmem:[#allocation4 + $0x288] sm:$0xff]
        %v1847 = vld [vmem:[#allocation4 + $0x290] sm:$0xff]
        %v1848 = vld [vmem:[#allocation4 + $0x298] sm:$0xff]
        %v1849 = vld [vmem:[#allocation4 + $0x2a0] sm:$0xff]
        %v1850 = vld [vmem:[#allocation4 + $0x2a8] sm:$0xff]
        %v1851 = vld [vmem:[#allocation4 + $0x2b0] sm:$0xff]
        %v1852 = vld [vmem:[#allocation4 + $0x2b8] sm:$0xff]
        %v1853 = vld [vmem:[#allocation4 + $0x2c0] sm:$0xff]
        %v1854 = vld [vmem:[#allocation4 + $0x2c8] sm:$0xff]
        %v1855 = vld [vmem:[#allocation4 + $0x2d0] sm:$0xff]
        %v1856 = vld [vmem:[#allocation4 + $0x2d8] sm:$0xff]
        %v1857 = vld [vmem:[#allocation4 + $0x2e0] sm:$0xff]
        %v1858 = vld [vmem:[#allocation4 + $0x2e8] sm:$0xff]
        %v1859 = vld [vmem:[#allocation4 + $0x2f0] sm:$0xff]
        %v1860 = vld [vmem:[#allocation4 + $0x2f8] sm:$0xff]
        %v1861 = vld [vmem:[#allocation4 + $0x300] sm:$0xff]
        %v1862 = vld [vmem:[#allocation4 + $0x308] sm:$0xff]
        %v1863 = vld [vmem:[#allocation4 + $0x310] sm:$0xff]
        %v1864 = vld [vmem:[#allocation4 + $0x318] sm:$0xff]
        %v1865 = vld [vmem:[#allocation4 + $0x320] sm:$0xff]
        %v1866 = vld [vmem:[#allocation4 + $0x328] sm:$0xff]
        %v1867 = vld [vmem:[#allocation4 + $0x330] sm:$0xff]
        %v1868 = vld [vmem:[#allocation4 + $0x338] sm:$0xff]
        %v1869 = vld [vmem:[#allocation4 + $0x340] sm:$0xff]
        %v1870 = vld [vmem:[#allocation4 + $0x348] sm:$0xff]
        %v1871 = vld [vmem:[#allocation4 + $0x350] sm:$0xff]
        %v1872 = vld [vmem:[#allocation4 + $0x358] sm:$0xff]
        %v1873 = vld [vmem:[#allocation4 + $0x360] sm:$0xff]
        %v1874 = vld [vmem:[#allocation4 + $0x368] sm:$0xff]
        %v1875 = vld [vmem:[#allocation4 + $0x370] sm:$0xff]
        %v1876 = vld [vmem:[#allocation4 + $0x378] sm:$0xff]
        %v1877 = vld [vmem:[#allocation4 + $0x380] sm:$0xff]
        %v1878 = vld [vmem:[#allocation4 + $0x388] sm:$0xff]
        %v1879 = vld [vmem:[#allocation4 + $0x390] sm:$0xff]
        %v1880 = vld [vmem:[#allocation4 + $0x398] sm:$0xff]
        %v1881 = vld [vmem:[#allocation4 + $0x3a0] sm:$0xff]
        %v1882 = vld [vmem:[#allocation4 + $0x3a8] sm:$0xff]
        %v1883 = vld [vmem:[#allocation4 + $0x3b0] sm:$0xff]
        %v1884 = vld [vmem:[#allocation4 + $0x3b8] sm:$0xff]
        %v1885 = vld [vmem:[#allocation4 + $0x3c0] sm:$0xff]
        %v1886 = vld [vmem:[#allocation4 + $0x3c8] sm:$0xff]
        %v1887 = vld [vmem:[#allocation4 + $0x3d0] sm:$0xff]
        %v1888 = vld [vmem:[#allocation4 + $0x3d8] sm:$0xff]
        %v1889 = vld [vmem:[#allocation4 + $0x3e0] sm:$0xff]
        %v1890 = vld [vmem:[#allocation4 + $0x3e8] sm:$0xff]
        %v1891 = vld [vmem:[#allocation4 + $0x3f0] sm:$0xff]
        %v1892 = vld [vmem:[#allocation4 + $0x3f8] sm:$0xff]
        %v1893 = vld [vmem:[%s8] sm:$0x1]
        %v1895 = vperm.slane %v1893, 0
        %1897 = vmatpush.msra.mxu0 %v1780
        %1898 = vmatpush.msra.mxu0 %v1779
        %1899 = vmatpush.msra.mxu0 %v1778
        %1900 = vmatpush.msra.mxu0 %v1777
        %1901 = vmatpush.msra.mxu0 %v1776
        %1902 = vmatpush.msra.mxu0 %v1775
        %1903 = vmatpush.msra.mxu0 %v1774
        %1904 = vmatpush.msra.mxu0 %v1773
        %1905 = vmatpush.msra.mxu0 %v1772
        %1906 = vmatpush.msra.mxu0 %v1771
        %1907 = vmatpush.msra.mxu0 %v1770
        %1908 = vmatpush.msra.mxu0 %v1769
        %1909 = vmatpush.msra.mxu0 %v1768
        %1910 = vmatpush.msra.mxu0 %v1767
        %1911 = vmatpush.msra.mxu0 %v1766
        %1912 = vmatpush.msra.mxu0 %v1765
        %1913 = vmatmul.f32.gmra.mxu0 %v1749
        %v1914 = vpop.f32.mrf.mxu0
        %v1915 = vadd.f32 %v1895, %v1914
        %1916 = vmatmul.f32.gmra.mxu0 %v1757
        %v1917 = vpop.f32.mrf.mxu0
        %v1918 = vadd.f32 %v1895, %v1917
        %1919 = vdwg.mxu0
        %1920 = vmatpush.msra.mxu0 %v1796
        %1921 = vmatpush.msra.mxu0 %v1795
        %1922 = vmatpush.msra.mxu0 %v1794
        %1923 = vmatpush.msra.mxu0 %v1793
        %1924 = vmatpush.msra.mxu0 %v1792
        %1925 = vmatpush.msra.mxu0 %v1791
        %1926 = vmatpush.msra.mxu0 %v1790
        %1927 = vmatpush.msra.mxu0 %v1789
        %1928 = vmatpush.msra.mxu0 %v1788
        %1929 = vmatpush.msra.mxu0 %v1787
        %1930 = vmatpush.msra.mxu0 %v1786
        %1931 = vmatpush.msra.mxu0 %v1785
        %1932 = vmatpush.msra.mxu0 %v1784
        %1933 = vmatpush.msra.mxu0 %v1783
        %1934 = vmatpush.msra.mxu0 %v1782
        %1935 = vmatpush.msra.mxu0 %v1781
        %1936 = vmatmul.f32.gmra.mxu0 %v1750
        %v1937 = vpop.f32.mrf.mxu0
        %v1938 = vadd.f32 %v1915, %v1937
        %1939 = vmatmul.f32.gmra.mxu0 %v1758
        %v1940 = vpop.f32.mrf.mxu0
        %v1941 = vadd.f32 %v1918, %v1940
        %1942 = vdwg.mxu0
        %1943 = vmatpush.msra.mxu0 %v1812
        %1944 = vmatpush.msra.mxu0 %v1811
        %1945 = vmatpush.msra.mxu0 %v1810
        %1946 = vmatpush.msra.mxu0 %v1809
        %1947 = vmatpush.msra.mxu0 %v1808
        %1948 = vmatpush.msra.mxu0 %v1807
        %1949 = vmatpush.msra.mxu0 %v1806
        %1950 = vmatpush.msra.mxu0 %v1805
        %1951 = vmatpush.msra.mxu0 %v1804
        %1952 = vmatpush.msra.mxu0 %v1803
        %1953 = vmatpush.msra.mxu0 %v1802
        %1954 = vmatpush.msra.mxu0 %v1801
        %1955 = vmatpush.msra.mxu0 %v1800
        %1956 = vmatpush.msra.mxu0 %v1799
        %1957 = vmatpush.msra.mxu0 %v1798
        %1958 = vmatpush.msra.mxu0 %v1797
        %1959 = vmatmul.f32.gmra.mxu0 %v1751
        %v1960 = vpop.f32.mrf.mxu0
        %v1961 = vadd.f32 %v1938, %v1960
        %1962 = vmatmul.f32.gmra.mxu0 %v1759
        %v1963 = vpop.f32.mrf.mxu0
        %v1964 = vadd.f32 %v1941, %v1963
        %1965 = vdwg.mxu0
        %1966 = vmatpush.msra.mxu0 %v1828
        %1967 = vmatpush.msra.mxu0 %v1827
        %1968 = vmatpush.msra.mxu0 %v1826
        %1969 = vmatpush.msra.mxu0 %v1825
        %1970 = vmatpush.msra.mxu0 %v1824
        %1971 = vmatpush.msra.mxu0 %v1823
        %1972 = vmatpush.msra.mxu0 %v1822
        %1973 = vmatpush.msra.mxu0 %v1821
        %1974 = vmatpush.msra.mxu0 %v1820
        %1975 = vmatpush.msra.mxu0 %v1819
        %1976 = vmatpush.msra.mxu0 %v1818
        %1977 = vmatpush.msra.mxu0 %v1817
        %1978 = vmatpush.msra.mxu0 %v1816
        %1979 = vmatpush.msra.mxu0 %v1815
        %1980 = vmatpush.msra.mxu0 %v1814
        %1981 = vmatpush.msra.mxu0 %v1813
        %1982 = vmatmul.f32.gmra.mxu0 %v1752
        %v1983 = vpop.f32.mrf.mxu0
        %v1984 = vadd.f32 %v1961, %v1983
        %1985 = vmatmul.f32.gmra.mxu0 %v1760
        %v1986 = vpop.f32.mrf.mxu0
        %v1987 = vadd.f32 %v1964, %v1986
        %1988 = vdwg.mxu0
        %1989 = vmatpush.msra.mxu0 %v1844
        %1990 = vmatpush.msra.mxu0 %v1843
        %1991 = vmatpush.msra.mxu0 %v1842
        %1992 = vmatpush.msra.mxu0 %v1841
        %1993 = vmatpush.msra.mxu0 %v1840
        %1994 = vmatpush.msra.mxu0 %v1839
        %1995 = vmatpush.msra.mxu0 %v1838
        %1996 = vmatpush.msra.mxu0 %v1837
        %1997 = vmatpush.msra.mxu0 %v1836
        %1998 = vmatpush.msra.mxu0 %v1835
        %1999 = vmatpush.msra.mxu0 %v1834
        %2000 = vmatpush.msra.mxu0 %v1833
        %2001 = vmatpush.msra.mxu0 %v1832
        %2002 = vmatpush.msra.mxu0 %v1831
        %2003 = vmatpush.msra.mxu0 %v1830
        %2004 = vmatpush.msra.mxu0 %v1829
        %2005 = vmatmul.f32.gmra.mxu0 %v1753
        %v2006 = vpop.f32.mrf.mxu0
        %v2007 = vadd.f32 %v1984, %v2006
        %2008 = vmatmul.f32.gmra.mxu0 %v1761
        %v2009 = vpop.f32.mrf.mxu0
        %v2010 = vadd.f32 %v1987, %v2009
        %2011 = vdwg.mxu0
        %2012 = vmatpush.msra.mxu0 %v1860
        %2013 = vmatpush.msra.mxu0 %v1859
        %2014 = vmatpush.msra.mxu0 %v1858
        %2015 = vmatpush.msra.mxu0 %v1857
        %2016 = vmatpush.msra.mxu0 %v1856
        %2017 = vmatpush.msra.mxu0 %v1855
        %2018 = vmatpush.msra.mxu0 %v1854
        %2019 = vmatpush.msra.mxu0 %v1853
        %2020 = vmatpush.msra.mxu0 %v1852
        %2021 = vmatpush.msra.mxu0 %v1851
        %2022 = vmatpush.msra.mxu0 %v1850
        %2023 = vmatpush.msra.mxu0 %v1849
        %2024 = vmatpush.msra.mxu0 %v1848
        %2025 = vmatpush.msra.mxu0 %v1847
        %2026 = vmatpush.msra.mxu0 %v1846
        %2027 = vmatpush.msra.mxu0 %v1845
        %2028 = vmatmul.f32.gmra.mxu0 %v1754
        %v2029 = vpop.f32.mrf.mxu0
        %v2030 = vadd.f32 %v2007, %v2029
        %2031 = vmatmul.f32.gmra.mxu0 %v1762
        %v2032 = vpop.f32.mrf.mxu0
        %v2033 = vadd.f32 %v2010, %v2032
        %2034 = vdwg.mxu0
        %2035 = vmatpush.msra.mxu0 %v1876
        %2036 = vmatpush.msra.mxu0 %v1875
        %2037 = vmatpush.msra.mxu0 %v1874
        %2038 = vmatpush.msra.mxu0 %v1873
        %2039 = vmatpush.msra.mxu0 %v1872
        %2040 = vmatpush.msra.mxu0 %v1871
        %2041 = vmatpush.msra.mxu0 %v1870
        %2042 = vmatpush.msra.mxu0 %v1869
        %2043 = vmatpush.msra.mxu0 %v1868
        %2044 = vmatpush.msra.mxu0 %v1867
        %2045 = vmatpush.msra.mxu0 %v1866
        %2046 = vmatpush.msra.mxu0 %v1865
        %2047 = vmatpush.msra.mxu0 %v1864
        %2048 = vmatpush.msra.mxu0 %v1863
        %2049 = vmatpush.msra.mxu0 %v1862
        %2050 = vmatpush.msra.mxu0 %v1861
        %2051 = vmatmul.f32.gmra.mxu0 %v1755
        %v2052 = vpop.f32.mrf.mxu0
        %v2053 = vadd.f32 %v2030, %v2052
        %2054 = vmatmul.f32.gmra.mxu0 %v1763
        %v2055 = vpop.f32.mrf.mxu0
        %v2056 = vadd.f32 %v2033, %v2055
        %2057 = vdwg.mxu0
        %2058 = vmatpush.msra.mxu0 %v1892
        %2059 = vmatpush.msra.mxu0 %v1891
        %2060 = vmatpush.msra.mxu0 %v1890
        %2061 = vmatpush.msra.mxu0 %v1889
        %2062 = vmatpush.msra.mxu0 %v1888
        %2063 = vmatpush.msra.mxu0 %v1887
        %2064 = vmatpush.msra.mxu0 %v1886
        %2065 = vmatpush.msra.mxu0 %v1885
        %2066 = vmatpush.msra.mxu0 %v1884
        %2067 = vmatpush.msra.mxu0 %v1883
        %2068 = vmatpush.msra.mxu0 %v1882
        %2069 = vmatpush.msra.mxu0 %v1881
        %2070 = vmatpush.msra.mxu0 %v1880
        %2071 = vmatpush.msra.mxu0 %v1879
        %2072 = vmatpush.msra.mxu0 %v1878
        %2073 = vmatpush.msra.mxu0 %v1877
        %2074 = vmatmul.f32.gmra.mxu0 %v1756
        %v2075 = vpop.f32.mrf.mxu0
        %v2076 = vadd.f32 %v2053, %v2075
        %2077 = vmatmul.f32.gmra.mxu0 %v1764
        %v2078 = vpop.f32.mrf.mxu0
        %v2079 = vadd.f32 %v2056, %v2078
        %2080 = vdwg.mxu0
        %v2081 = vld [vmem:[#allocation2] sm:$0xff]
        %v2082 = vld [vmem:[#allocation2 + $0x8] sm:$0xff]
        %v2083 = vld [vmem:[%s531] sm:$0xff]
        %v2084 = vld [vmem:[%s531 + $0x8] sm:$0xff]
        %v2085 = vld [vmem:[%s531 + $0x10] sm:$0xff]
        %v2086 = vld [vmem:[%s531 + $0x18] sm:$0xff]
        %v2087 = vld [vmem:[%s531 + $0x20] sm:$0xff]
        %v2088 = vld [vmem:[%s531 + $0x28] sm:$0xff]
        %v2089 = vld [vmem:[%s531 + $0x30] sm:$0xff]
        %v2090 = vld [vmem:[%s531 + $0x38] sm:$0xff]
        %v2091 = vld [vmem:[%s531 + $0x40] sm:$0xff]
        %v2092 = vld [vmem:[%s531 + $0x48] sm:$0xff]
        %v2093 = vld [vmem:[%s531 + $0x50] sm:$0xff]
        %v2094 = vld [vmem:[%s531 + $0x58] sm:$0xff]
        %v2095 = vld [vmem:[%s531 + $0x60] sm:$0xff]
        %v2096 = vld [vmem:[%s531 + $0x68] sm:$0xff]
        %v2097 = vld [vmem:[%s531 + $0x70] sm:$0xff]
        %v2098 = vld [vmem:[%s531 + $0x78] sm:$0xff]
        %2099 = vmatpush.msra.mxu0 %v2098
        %2100 = vmatpush.msra.mxu0 %v2097
        %2101 = vmatpush.msra.mxu0 %v2096
        %2102 = vmatpush.msra.mxu0 %v2095
        %2103 = vmatpush.msra.mxu0 %v2094
        %2104 = vmatpush.msra.mxu0 %v2093
        %2105 = vmatpush.msra.mxu0 %v2092
        %2106 = vmatpush.msra.mxu0 %v2091
        %2107 = vmatpush.msra.mxu0 %v2090
        %2108 = vmatpush.msra.mxu0 %v2089
        %2109 = vmatpush.msra.mxu0 %v2088
        %2110 = vmatpush.msra.mxu0 %v2087
        %2111 = vmatpush.msra.mxu0 %v2086
        %2112 = vmatpush.msra.mxu0 %v2085
        %2113 = vmatpush.msra.mxu0 %v2084
        %2114 = vmatpush.msra.mxu0 %v2083
        %2115 = vmatmul.f32.gmra.mxu0 %v2076
        %v2116 = vpop.f32.mrf.mxu0
        %v2117 = vadd.f32 0.0, %v2116
        %2118 = vmatmul.f32.gmra.mxu0 %v2079
        %v2119 = vpop.f32.mrf.mxu0
        %v2120 = vadd.f32 0.0, %v2119
        %2121 = vdwg.mxu0
        %v2122 = vadd.f32 %v2081, %v2117
        %v2123 = vadd.f32 %v2082, %v2120
        %2124 = vst.msk [vmem:[#allocation2] sm:$0xff] %vm554, %v2122
        %2125 = vst.msk [vmem:[#allocation2 + $0x8] sm:$0xff] %vm554, %v2123
        %p2126 = scmp.eq.s32.totalorder %s31, 1
        // Predicated region
        $region111: #{tpu_custom_call.1} parent=97 // pred_check
          %p2127 = pneg %p2126
        $region112: #{tpu_custom_call.1} parent=97 // pred_check_branch
          %2129 = sbr.rel (%p2127) target = $region114
        $region113: #{tpu_custom_call.1} parent=97 // pred_region
          %v2130 = vld [vmem:[#allocation2] sm:$0xff]
          %v2131 = vld [vmem:[#allocation2 + $0x8] sm:$0xff]
          %v2132 = vld [vmem:[%s10] sm:$0x1]
          %v2134 = vperm.slane %v2132, 0
          %v2136 = vadd.f32 %v2130, %v2134
          %v2137 = vadd.f32 %v2131, %v2134
          %2138 = vst.msk [vmem:[%s518] sm:$0xff] %vm554, %v2136
          %2139 = vst.msk [vmem:[%s518 + $0x8] sm:$0xff] %vm554, %v2137
        $region114: #{tpu_custom_call.1} parent=97 // pred_fallthru
          _
        %s2140 = sand.u32 %s297, 1
        %s2141 = scalar_lea.sflag [#allocation6], %s2140
        %s2142 = sand.u32 %s297, 1
        %s2143 = smul.addr %s2142, 16
        %s2144 = scalar_lea.vmem [#allocation7], %s2143
        // Predicated region
        $region115: #{tpu_custom_call.1} parent=97 // pred_check
          %p2145 = pneg %p307
        $region116: #{tpu_custom_call.1} parent=97 // pred_check_branch
          %2147 = sbr.rel (%p2145) target = $region118
        $region117: #{tpu_custom_call.1} parent=97 // pred_region
          %2149 = vsyncadd %s2141, 0
          %s2150 = smul.addr %s30, 2
          %s2151 = smul.addr %s2150, 8
          %s2152 = scalar_lea.hbm %s11, %s2151
          %s2153 = sshll.u32 %s2144, 4
          %s2154 = int_to_ptr.vmem [resolvable:$true] %s2153
          %s2155 = sshll.u32 %s2152, 4
          %s2156 = int_to_ptr.hbm [resolvable:$true] %s2155
          %2161 = dma.vmem_to_hbm [thread:$0]  %s2154, 256, %s2156, %s2141, 128, 128, 8
        $region118: #{tpu_custom_call.1} parent=97 // pred_fallthru
          _
      $region98: #{tpu_custom_call.1} parent=5 // pred_fallthru
        _
      %p2162 = scmp.le.s32.totalorder 2, %s21
      // Predicated region
      $region119: #{tpu_custom_call.1} parent=5 // pred_check
        %p2163 = pneg %p2162
      $region120: #{tpu_custom_call.1} parent=5 // pred_check_branch
        %2165 = sbr.rel (%p2163) target = $region122
      $region121: #{tpu_custom_call.1} parent=5 // pred_region
        %s2166 = ssub.s32 %s21, 2
        // Predicated region
        $region123: #{tpu_custom_call.1} parent=121 // pred_check
          %p2167 = pneg %p313
        $region124: #{tpu_custom_call.1} parent=121 // pred_check_branch
          %2169 = sbr.rel (%p2167) target = $region126
        $region125: #{tpu_custom_call.1} parent=121 // pred_region
          %s2170 = sand.u32 %s298, 1
          %s2171 = scalar_lea.sflag [#allocation6], %s2170
          %s2172 = sand.u32 %s298, 1
          %s2173 = smul.addr %s2172, 16
          %s2174 = scalar_lea.vmem [#allocation7], %s2173
          %2176 = dma.done %s2171, 256
        $region126: #{tpu_custom_call.1} parent=121 // pred_fallthru
          _
      $region122: #{tpu_custom_call.1} parent=5 // pred_fallthru
        _
    $region6: #{tpu_custom_call.1} parent=1 // loop_footer
      %s25 = sadd.s32 1, %s21
    $region7: #{tpu_custom_call.1} parent=1 // loop_footer_branch
      %20 = sbr.rel target = $region3
    $region8: #{tpu_custom_call.1} parent=1 // loop_exit
      _
    %2177 = vsyncpa [#allocation5], 1
    %s2178 = scalar_lea.sflag [#allocation5], 1
    %2179 = vsyncpa %s2178, 1
    %2180 = vsyncpa [#allocation6], 1
    %s2181 = scalar_lea.sflag [#allocation6], 1
    %2182 = vsyncpa %s2181, 1

</llo_original>
